<compile_context>
chip_gen: v7x
topology: tpu7x:2x2x1
jax: 0.10.0
libtpu: 0.0.40
codegen_flags: <defaults>
</compile_context>

<pallas_src>
import jax
import jax.numpy as jnp
from jax import lax
from jax.experimental import pallas as pl
from jax.experimental.pallas import tpu as pltpu


# ----------------------------------------------------------------------------
# Fused kernel: conv1 -> conv2 -> conv3 -> linear -> sigmoid, one batch tile.
# ----------------------------------------------------------------------------
def _fused_mnist_kernel(g_ref, w1_ref, b1_ref, w2_ref, b2_ref,
                        w3_ref, b3_ref, wl_ref, bl_ref, o_ref):
    f32 = jnp.float32
    cdt = w1_ref.dtype                       # MXU compute dtype (bf16)

    # --- conv1 + ReLU --------------------------------------------------------
    # g rows    = (image, conv2 output position y2*4+x2)
    # g columns = (kh2, kw2, kh1, kw1) flattened (256)
    # w1 is block-diagonal over the 16 conv2 offsets (kh2,kw2), so the result
    # lands directly in conv2's im2col layout: cols2[:, (kh2*4+kw2)*32 + c].
    cols2 = jnp.dot(g_ref[...], w1_ref[...], preferred_element_type=f32)
    cols2 = jnp.maximum(cols2 + b1_ref[...], 0.0)            # (tb*16, 512) f32

    # --- conv2 + ReLU --------------------------------------------------------
    h2 = jnp.dot(cols2.astype(cdt), w2_ref[...], preferred_element_type=f32)
    h2 = jnp.maximum(h2 + b2_ref[...], 0.0)                  # (tb*16, 64) f32

    # --- conv3 + ReLU  (1x1 output: sum over the 4x4 spatial positions) ------
    tb = h2.shape[0] // 16
    h2 = h2.reshape(tb, 16, 64).astype(cdt)                  # leading split only
    acc = jnp.zeros((tb, 128), f32)
    for p in range(16):                                      # unrolled, 16 small MXU ops
        acc = acc + jnp.dot(h2[:, p, :], w3_ref[p], preferred_element_type=f32)
    h3 = jnp.maximum(acc + b3_ref[...], 0.0)                 # (tb, 128) f32

    # --- linear (lane-padded to 128) + numerically stable sigmoid ------------
    z = jnp.dot(h3.astype(cdt), wl_ref[...], preferred_element_type=f32)
    z = z + bl_ref[...]                                      # (tb, 128) f32
    e = jnp.exp(-jnp.abs(z))                                 # EUP, never overflows
    s = pl.reciprocal(1.0 + e, approx=True)                  # 1/(1+e) via EUP
    o_ref[...] = jnp.where(z >= 0.0, s, 1.0 - s)             # sigmoid(z)


# ----------------------------------------------------------------------------
# Host-side (XLA) input prep: conv2-ordered patch columns from the raw image.
# ----------------------------------------------------------------------------
def _build_patch_matrix(x):
    """x: (B, 1, 28, 28) NCHW  ->  g: (B*16, 256).

    g[b*16 + (y2*4 + x2), (kh2*4 + kw2)*16 + (kh1*4 + kw1)]
        = x[b, 0, 4*y2 + 2*kh2 + kh1, 4*x2 + 2*kw2 + kw1]
    i.e. the conv1 patch (kh1,kw1) feeding conv1-output position
    (2*y2+kh2, 2*x2+kw2), which is conv2's patch entry (kh2,kw2) at its
    output position (y2,x2).
    """
    B = x.shape[0]
    img = x[:, 0]                                            # (B, 28, 28)
    o = jnp.arange(4)
    idx = (4 * o[:, None, None] + 2 * o[None, :, None]
           + o[None, None, :]).reshape(-1)                   # (64,) order (y2,kh2,kh1)
    g = jnp.take(img, idx, axis=1)                           # (B, 64, 28)
    g = jnp.take(g, idx, axis=2)                             # (B, 64, 64)
    g = g.reshape(B, 4, 4, 4, 4, 4, 4)                       # (B, y2,kh2,kh1, x2,kw2,kw1)
    g = g.transpose(0, 1, 4, 2, 5, 3, 6)                     # (B, y2,x2, kh2,kw2, kh1,kw1)
    return g.reshape(B * 16, 256)


# ----------------------------------------------------------------------------
# One-time weight repacking (PyTorch layouts -> kernel matmul layouts).
# ----------------------------------------------------------------------------
def prepare_params(params, compute_dtype=jnp.bfloat16):
    f32 = jnp.float32
    w1 = params["conv1_w"].astype(f32)       # (32, 1, 4, 4)
    w2 = params["conv2_w"].astype(f32)       # (64, 32, 4, 4)
    w3 = params["conv3_w"].astype(f32)       # (128, 64, 4, 4)
    wl = params["lin_w"].astype(f32)         # (10, 128)  (torch Linear: out, in)

    w1m = w1.reshape(32, 16).T                               # (16, 32), rows = (kh1*4+kw1)
    w1bd = jnp.kron(jnp.eye(16, dtype=f32), w1m)             # (256, 512) block-diag
    b1t = jnp.tile(params["conv1_b"].astype(f32), 16)        # (512,)

    w2m = w2.transpose(2, 3, 1, 0).reshape(512, 64)          # rows = (kh2*4+kw2)*32 + c
    w3r = w3.transpose(2, 3, 1, 0).reshape(16, 64, 128)      # [p=(kh*4+kw), c, o3]

    wlp = jnp.zeros((128, 128), f32).at[:, :10].set(wl.T)    # lane-padded linear
    blp = jnp.zeros((128,), f32).at[:10].set(params["lin_b"].astype(f32))

    return {
        "w1bd": w1bd.astype(compute_dtype),
        "b1": b1t.reshape(1, 512),
        "w2": w2m.astype(compute_dtype),
        "b2": params["conv2_b"].astype(f32).reshape(1, 64),
        "w3": w3r.astype(compute_dtype),
        "b3": params["conv3_b"].astype(f32).reshape(1, 128),
        "wl": wlp.astype(compute_dtype),
        "bl": blp.reshape(1, 128),
    }


# ----------------------------------------------------------------------------
# Forward pass (single pallas_call, grid over batch tiles).
# ----------------------------------------------------------------------------
@jax.jit
def mnist_classifier_forward(prepared, x):
    # x: (B, 1, 28, 28) float32
    B = x.shape[0]
    tb = 64 if B >= 64 else 8                                # batch tile (images)
    bp = ((B + tb - 1) // tb) * tb
    g = _build_patch_matrix(x).astype(prepared["w1bd"].dtype)  # (B*16, 256)
    if bp != B:
        g = jnp.pad(g, ((0, (bp - B) * 16), (0, 0)))

    out = pl.pallas_call(
        _fused_mnist_kernel,
        out_shape=jax.ShapeDtypeStruct((bp, 128), jnp.float32),
        grid=(bp // tb,),
        in_specs=[
            pl.BlockSpec((tb * 16, 256), lambda i: (i, 0)),     # patch columns (batch tile)
            pl.BlockSpec((256, 512), lambda i: (0, 0)),         # conv1 (block-diag), VMEM-resident
            pl.BlockSpec((1, 512), lambda i: (0, 0)),
            pl.BlockSpec((512, 64), lambda i: (0, 0)),          # conv2
            pl.BlockSpec((1, 64), lambda i: (0, 0)),
            pl.BlockSpec((16, 64, 128), lambda i: (0, 0, 0)),   # conv3 (per-position blocks)
            pl.BlockSpec((1, 128), lambda i: (0, 0)),
            pl.BlockSpec((128, 128), lambda i: (0, 0)),         # linear (lane-padded)
            pl.BlockSpec((1, 128), lambda i: (0, 0)),
        ],
        out_specs=pl.BlockSpec((tb, 128), lambda i: (i, 0)),    # lane-dense output
        compiler_params=pltpu.CompilerParams(
            dimension_semantics=("parallel",)),
    )(g, prepared["w1bd"], prepared["b1"], prepared["w2"], prepared["b2"],
      prepared["w3"], prepared["b3"], prepared["wl"], prepared["bl"])

    # TODO(synk): `nn.d(p=0.5)` in the reference is not a real torch module
    # (presumably nn.Dropout); treated as identity (eval-mode dropout).
    return out[:B, :10]


# ----------------------------------------------------------------------------
# Parameters (PyTorch layouts) and a pure-JAX f32 reference for the check.
# ----------------------------------------------------------------------------
def init_params(key):
    ks = jax.random.split(key, 8)
    scale = 0.05
    return {
        "conv1_w": scale * jax.random.normal(ks[0], (32, 1, 4, 4), jnp.float32),
        "conv1_b": scale * jax.random.normal(ks[1], (32,), jnp.float32),
        "conv2_w": scale * jax.random.normal(ks[2], (64, 32, 4, 4), jnp.float32),
        "conv2_b": scale * jax.random.normal(ks[3], (64,), jnp.float32),
        "conv3_w": scale * jax.random.normal(ks[4], (128, 64, 4, 4), jnp.float32),
        "conv3_b": scale * jax.random.normal(ks[5], (128,), jnp.float32),
        "lin_w": scale * jax.random.normal(ks[6], (10, 128), jnp.float32),
        "lin_b": scale * jax.random.normal(ks[7], (10,), jnp.float32),
    }


def _reference_forward(params, x):
    def conv(x, w, b):
        y = lax.conv_general_dilated(x, w, window_strides=(2, 2), padding="VALID",
                                     dimension_numbers=("NCHW", "OIHW", "NCHW"))
        return jnp.maximum(y + b[None, :, None, None], 0.0)

    h = conv(x, params["conv1_w"], params["conv1_b"])
    h = conv(h, params["conv2_w"], params["conv2_b"])
    h = conv(h, params["conv3_w"], params["conv3_b"])
    h = h.reshape(h.shape[0], -1)
    logits = h @ params["lin_w"].T + params["lin_b"]
    return jax.nn.sigmoid(logits)


if __name__ == "__main__":
    key = jax.random.PRNGKey(0)
    pkey, xkey = jax.random.split(key)
    params = init_params(pkey)
    prepared = prepare_params(params)                        # one-time repack (bf16)
    x = jax.random.normal(xkey, (2, 1, 28, 28), jnp.float32)  # MNIST-shaped input

    out = mnist_classifier_forward(prepared, x)
    out = jax.block_until_ready(out)
    assert out.shape == (2, 10), out.shape

    ref = _reference_forward(params, x)
    err = float(jnp.max(jnp.abs(out - ref)))
    # bf16 MXU operands + approx reciprocal: observed error ~1e-3 on sigmoid
    # outputs; 2e-2 is a loose-but-meaningful bound vs the f32 reference.
    assert err < 2e-2, err

    print("KERNEL_OK")
</pallas_src>

<mosaic_0001>
module attributes {stable_mosaic.version = 11 : i64} {
  func.func @_fused_mnist_kernel(%arg0: i32, %arg1: memref<128x256xbf16, #tpu.memory_space<vmem>>, %arg2: memref<256x512xbf16, #tpu.memory_space<vmem>>, %arg3: memref<1x512xf32, #tpu.memory_space<vmem>>, %arg4: memref<512x64xbf16, #tpu.memory_space<vmem>>, %arg5: memref<1x64xf32, #tpu.memory_space<vmem>>, %arg6: memref<16x64x128xbf16, #tpu.memory_space<vmem>>, %arg7: memref<1x128xf32, #tpu.memory_space<vmem>>, %arg8: memref<128x128xbf16, #tpu.memory_space<vmem>>, %arg9: memref<1x128xf32, #tpu.memory_space<vmem>>, %arg10: memref<8x128xf32, #tpu.memory_space<vmem>>) attributes {dimension_semantics = [#tpu.dimension_semantics<parallel>], iteration_bounds = array<i64: 1>, scalar_prefetch = 0 : i64, scratch_operands = 0 : i64, tpu.core_type = #tpu.core_type<tc>, window_params = [{transform_indices = @transform_0, window_bounds = array<i64: 128, 256>}, {pipeline_mode = #tpu.pipeline_mode<synchronous>, transform_indices = @transform_1, window_bounds = array<i64: 256, 512>}, {pipeline_mode = #tpu.pipeline_mode<synchronous>, transform_indices = @transform_2, window_bounds = array<i64: 1, 512>}, {pipeline_mode = #tpu.pipeline_mode<synchronous>, transform_indices = @transform_3, window_bounds = array<i64: 512, 64>}, {pipeline_mode = #tpu.pipeline_mode<synchronous>, transform_indices = @transform_4, window_bounds = array<i64: 1, 64>}, {pipeline_mode = #tpu.pipeline_mode<synchronous>, transform_indices = @transform_5, window_bounds = array<i64: 16, 64, 128>}, {pipeline_mode = #tpu.pipeline_mode<synchronous>, transform_indices = @transform_6, window_bounds = array<i64: 1, 128>}, {pipeline_mode = #tpu.pipeline_mode<synchronous>, transform_indices = @transform_7, window_bounds = array<i64: 128, 128>}, {pipeline_mode = #tpu.pipeline_mode<synchronous>, transform_indices = @transform_8, window_bounds = array<i64: 1, 128>}, {transform_indices = @transform_9, window_bounds = array<i64: 8, 128>}]} {
    %c0 = arith.constant 0 : index
    %c0_0 = arith.constant 0 : index
    %0 = vector.load %arg1[%c0, %c0_0] : memref<128x256xbf16, #tpu.memory_space<vmem>>, vector<128x256xbf16>
    %c0_1 = arith.constant 0 : index
    %c0_2 = arith.constant 0 : index
    %1 = vector.load %arg2[%c0_1, %c0_2] : memref<256x512xbf16, #tpu.memory_space<vmem>>, vector<256x512xbf16>
    %cst = arith.constant dense<0.000000e+00> : vector<128x512xf32>
    %2 = tpu.matmul %0, %1, %cst {dimension_numbers = #tpu.dot_dimension_numbers<[1], [0], [0], [1], [0, 0, 1, 1], [], []>} : vector<128x256xbf16>, vector<256x512xbf16>, vector<128x512xf32> -> vector<128x512xf32>
    %c0_3 = arith.constant 0 : index
    %c0_4 = arith.constant 0 : index
    %3 = vector.load %arg3[%c0_3, %c0_4] : memref<1x512xf32, #tpu.memory_space<vmem>>, vector<1x512xf32>
    %4 = vector.broadcast %3 : vector<1x512xf32> to vector<128x512xf32>
    %5 = arith.addf %2, %4 : vector<128x512xf32>
    %cst_5 = arith.constant 0.000000e+00 : f32
    %6 = vector.broadcast %cst_5 : f32 to vector<128x512xf32>
    %7 = arith.maximumf %5, %6 : vector<128x512xf32>
    %8 = arith.truncf %7 : vector<128x512xf32> to vector<128x512xbf16>
    %c0_6 = arith.constant 0 : index
    %c0_7 = arith.constant 0 : index
    %9 = vector.load %arg4[%c0_6, %c0_7] : memref<512x64xbf16, #tpu.memory_space<vmem>>, vector<512x64xbf16>
    %cst_8 = arith.constant dense<0.000000e+00> : vector<128x64xf32>
    %10 = tpu.matmul %8, %9, %cst_8 {dimension_numbers = #tpu.dot_dimension_numbers<[1], [0], [0], [1], [0, 0, 1, 1], [], []>} : vector<128x512xbf16>, vector<512x64xbf16>, vector<128x64xf32> -> vector<128x64xf32>
    %c0_9 = arith.constant 0 : index
    %c0_10 = arith.constant 0 : index
    %11 = vector.load %arg5[%c0_9, %c0_10] : memref<1x64xf32, #tpu.memory_space<vmem>>, vector<1x64xf32>
    %12 = vector.broadcast %11 : vector<1x64xf32> to vector<128x64xf32>
    %13 = arith.addf %10, %12 : vector<128x64xf32>
    %cst_11 = arith.constant 0.000000e+00 : f32
    %14 = vector.broadcast %cst_11 : f32 to vector<128x64xf32>
    %15 = arith.maximumf %13, %14 : vector<128x64xf32>
    %16 = vector.shape_cast %15 : vector<128x64xf32> to vector<8x16x64xf32>
    %17 = arith.truncf %16 : vector<8x16x64xf32> to vector<8x16x64xbf16>
    %cst_12 = arith.constant 0.000000e+00 : f32
    %18 = vector.broadcast %cst_12 : f32 to vector<8x128xf32>
    %19 = vector.extract_strided_slice %17 {offsets = [0, 0, 0], sizes = [8, 1, 64], strides = [1, 1, 1]} : vector<8x16x64xbf16> to vector<8x1x64xbf16>
    %20 = vector.shape_cast %19 : vector<8x1x64xbf16> to vector<8x64xbf16>
    %c0_13 = arith.constant 0 : index
    %c0_14 = arith.constant 0 : index
    %c0_15 = arith.constant 0 : index
    %21 = vector.load %arg6[%c0_13, %c0_14, %c0_15] : memref<16x64x128xbf16, #tpu.memory_space<vmem>>, vector<1x64x128xbf16>
    %22 = vector.shape_cast %21 : vector<1x64x128xbf16> to vector<64x128xbf16>
    %cst_16 = arith.constant dense<0.000000e+00> : vector<8x128xf32>
    %23 = tpu.matmul %20, %22, %cst_16 {dimension_numbers = #tpu.dot_dimension_numbers<[1], [0], [0], [1], [0, 0, 1, 1], [], []>} : vector<8x64xbf16>, vector<64x128xbf16>, vector<8x128xf32> -> vector<8x128xf32>
    %24 = arith.addf %18, %23 : vector<8x128xf32>
    %25 = vector.extract_strided_slice %17 {offsets = [0, 1, 0], sizes = [8, 1, 64], strides = [1, 1, 1]} : vector<8x16x64xbf16> to vector<8x1x64xbf16>
    %26 = vector.shape_cast %25 : vector<8x1x64xbf16> to vector<8x64xbf16>
    %c1 = arith.constant 1 : index
    %c0_17 = arith.constant 0 : index
    %c0_18 = arith.constant 0 : index
    %27 = vector.load %arg6[%c1, %c0_17, %c0_18] : memref<16x64x128xbf16, #tpu.memory_space<vmem>>, vector<1x64x128xbf16>
    %28 = vector.shape_cast %27 : vector<1x64x128xbf16> to vector<64x128xbf16>
    %cst_19 = arith.constant dense<0.000000e+00> : vector<8x128xf32>
    %29 = tpu.matmul %26, %28, %cst_19 {dimension_numbers = #tpu.dot_dimension_numbers<[1], [0], [0], [1], [0, 0, 1, 1], [], []>} : vector<8x64xbf16>, vector<64x128xbf16>, vector<8x128xf32> -> vector<8x128xf32>
    %30 = arith.addf %24, %29 : vector<8x128xf32>
    %31 = vector.extract_strided_slice %17 {offsets = [0, 2, 0], sizes = [8, 1, 64], strides = [1, 1, 1]} : vector<8x16x64xbf16> to vector<8x1x64xbf16>
    %32 = vector.shape_cast %31 : vector<8x1x64xbf16> to vector<8x64xbf16>
    %c2 = arith.constant 2 : index
    %c0_20 = arith.constant 0 : index
    %c0_21 = arith.constant 0 : index
    %33 = vector.load %arg6[%c2, %c0_20, %c0_21] : memref<16x64x128xbf16, #tpu.memory_space<vmem>>, vector<1x64x128xbf16>
    %34 = vector.shape_cast %33 : vector<1x64x128xbf16> to vector<64x128xbf16>
    %cst_22 = arith.constant dense<0.000000e+00> : vector<8x128xf32>
    %35 = tpu.matmul %32, %34, %cst_22 {dimension_numbers = #tpu.dot_dimension_numbers<[1], [0], [0], [1], [0, 0, 1, 1], [], []>} : vector<8x64xbf16>, vector<64x128xbf16>, vector<8x128xf32> -> vector<8x128xf32>
    %36 = arith.addf %30, %35 : vector<8x128xf32>
    %37 = vector.extract_strided_slice %17 {offsets = [0, 3, 0], sizes = [8, 1, 64], strides = [1, 1, 1]} : vector<8x16x64xbf16> to vector<8x1x64xbf16>
    %38 = vector.shape_cast %37 : vector<8x1x64xbf16> to vector<8x64xbf16>
    %c3 = arith.constant 3 : index
    %c0_23 = arith.constant 0 : index
    %c0_24 = arith.constant 0 : index
    %39 = vector.load %arg6[%c3, %c0_23, %c0_24] : memref<16x64x128xbf16, #tpu.memory_space<vmem>>, vector<1x64x128xbf16>
    %40 = vector.shape_cast %39 : vector<1x64x128xbf16> to vector<64x128xbf16>
    %cst_25 = arith.constant dense<0.000000e+00> : vector<8x128xf32>
    %41 = tpu.matmul %38, %40, %cst_25 {dimension_numbers = #tpu.dot_dimension_numbers<[1], [0], [0], [1], [0, 0, 1, 1], [], []>} : vector<8x64xbf16>, vector<64x128xbf16>, vector<8x128xf32> -> vector<8x128xf32>
    %42 = arith.addf %36, %41 : vector<8x128xf32>
    %43 = vector.extract_strided_slice %17 {offsets = [0, 4, 0], sizes = [8, 1, 64], strides = [1, 1, 1]} : vector<8x16x64xbf16> to vector<8x1x64xbf16>
    %44 = vector.shape_cast %43 : vector<8x1x64xbf16> to vector<8x64xbf16>
    %c4 = arith.constant 4 : index
    %c0_26 = arith.constant 0 : index
    %c0_27 = arith.constant 0 : index
    %45 = vector.load %arg6[%c4, %c0_26, %c0_27] : memref<16x64x128xbf16, #tpu.memory_space<vmem>>, vector<1x64x128xbf16>
    %46 = vector.shape_cast %45 : vector<1x64x128xbf16> to vector<64x128xbf16>
    %cst_28 = arith.constant dense<0.000000e+00> : vector<8x128xf32>
    %47 = tpu.matmul %44, %46, %cst_28 {dimension_numbers = #tpu.dot_dimension_numbers<[1], [0], [0], [1], [0, 0, 1, 1], [], []>} : vector<8x64xbf16>, vector<64x128xbf16>, vector<8x128xf32> -> vector<8x128xf32>
    %48 = arith.addf %42, %47 : vector<8x128xf32>
    %49 = vector.extract_strided_slice %17 {offsets = [0, 5, 0], sizes = [8, 1, 64], strides = [1, 1, 1]} : vector<8x16x64xbf16> to vector<8x1x64xbf16>
    %50 = vector.shape_cast %49 : vector<8x1x64xbf16> to vector<8x64xbf16>
    %c5 = arith.constant 5 : index
    %c0_29 = arith.constant 0 : index
    %c0_30 = arith.constant 0 : index
    %51 = vector.load %arg6[%c5, %c0_29, %c0_30] : memref<16x64x128xbf16, #tpu.memory_space<vmem>>, vector<1x64x128xbf16>
    %52 = vector.shape_cast %51 : vector<1x64x128xbf16> to vector<64x128xbf16>
    %cst_31 = arith.constant dense<0.000000e+00> : vector<8x128xf32>
    %53 = tpu.matmul %50, %52, %cst_31 {dimension_numbers = #tpu.dot_dimension_numbers<[1], [0], [0], [1], [0, 0, 1, 1], [], []>} : vector<8x64xbf16>, vector<64x128xbf16>, vector<8x128xf32> -> vector<8x128xf32>
    %54 = arith.addf %48, %53 : vector<8x128xf32>
    %55 = vector.extract_strided_slice %17 {offsets = [0, 6, 0], sizes = [8, 1, 64], strides = [1, 1, 1]} : vector<8x16x64xbf16> to vector<8x1x64xbf16>
    %56 = vector.shape_cast %55 : vector<8x1x64xbf16> to vector<8x64xbf16>
    %c6 = arith.constant 6 : index
    %c0_32 = arith.constant 0 : index
    %c0_33 = arith.constant 0 : index
    %57 = vector.load %arg6[%c6, %c0_32, %c0_33] : memref<16x64x128xbf16, #tpu.memory_space<vmem>>, vector<1x64x128xbf16>
    %58 = vector.shape_cast %57 : vector<1x64x128xbf16> to vector<64x128xbf16>
    %cst_34 = arith.constant dense<0.000000e+00> : vector<8x128xf32>
    %59 = tpu.matmul %56, %58, %cst_34 {dimension_numbers = #tpu.dot_dimension_numbers<[1], [0], [0], [1], [0, 0, 1, 1], [], []>} : vector<8x64xbf16>, vector<64x128xbf16>, vector<8x128xf32> -> vector<8x128xf32>
    %60 = arith.addf %54, %59 : vector<8x128xf32>
    %61 = vector.extract_strided_slice %17 {offsets = [0, 7, 0], sizes = [8, 1, 64], strides = [1, 1, 1]} : vector<8x16x64xbf16> to vector<8x1x64xbf16>
    %62 = vector.shape_cast %61 : vector<8x1x64xbf16> to vector<8x64xbf16>
    %c7 = arith.constant 7 : index
    %c0_35 = arith.constant 0 : index
    %c0_36 = arith.constant 0 : index
    %63 = vector.load %arg6[%c7, %c0_35, %c0_36] : memref<16x64x128xbf16, #tpu.memory_space<vmem>>, vector<1x64x128xbf16>
    %64 = vector.shape_cast %63 : vector<1x64x128xbf16> to vector<64x128xbf16>
    %cst_37 = arith.constant dense<0.000000e+00> : vector<8x128xf32>
    %65 = tpu.matmul %62, %64, %cst_37 {dimension_numbers = #tpu.dot_dimension_numbers<[1], [0], [0], [1], [0, 0, 1, 1], [], []>} : vector<8x64xbf16>, vector<64x128xbf16>, vector<8x128xf32> -> vector<8x128xf32>
    %66 = arith.addf %60, %65 : vector<8x128xf32>
    %67 = vector.extract_strided_slice %17 {offsets = [0, 8, 0], sizes = [8, 1, 64], strides = [1, 1, 1]} : vector<8x16x64xbf16> to vector<8x1x64xbf16>
    %68 = vector.shape_cast %67 : vector<8x1x64xbf16> to vector<8x64xbf16>
    %c8 = arith.constant 8 : index
    %c0_38 = arith.constant 0 : index
    %c0_39 = arith.constant 0 : index
    %69 = vector.load %arg6[%c8, %c0_38, %c0_39] : memref<16x64x128xbf16, #tpu.memory_space<vmem>>, vector<1x64x128xbf16>
    %70 = vector.shape_cast %69 : vector<1x64x128xbf16> to vector<64x128xbf16>
    %cst_40 = arith.constant dense<0.000000e+00> : vector<8x128xf32>
    %71 = tpu.matmul %68, %70, %cst_40 {dimension_numbers = #tpu.dot_dimension_numbers<[1], [0], [0], [1], [0, 0, 1, 1], [], []>} : vector<8x64xbf16>, vector<64x128xbf16>, vector<8x128xf32> -> vector<8x128xf32>
    %72 = arith.addf %66, %71 : vector<8x128xf32>
    %73 = vector.extract_strided_slice %17 {offsets = [0, 9, 0], sizes = [8, 1, 64], strides = [1, 1, 1]} : vector<8x16x64xbf16> to vector<8x1x64xbf16>
    %74 = vector.shape_cast %73 : vector<8x1x64xbf16> to vector<8x64xbf16>
    %c9 = arith.constant 9 : index
    %c0_41 = arith.constant 0 : index
    %c0_42 = arith.constant 0 : index
    %75 = vector.load %arg6[%c9, %c0_41, %c0_42] : memref<16x64x128xbf16, #tpu.memory_space<vmem>>, vector<1x64x128xbf16>
    %76 = vector.shape_cast %75 : vector<1x64x128xbf16> to vector<64x128xbf16>
    %cst_43 = arith.constant dense<0.000000e+00> : vector<8x128xf32>
    %77 = tpu.matmul %74, %76, %cst_43 {dimension_numbers = #tpu.dot_dimension_numbers<[1], [0], [0], [1], [0, 0, 1, 1], [], []>} : vector<8x64xbf16>, vector<64x128xbf16>, vector<8x128xf32> -> vector<8x128xf32>
    %78 = arith.addf %72, %77 : vector<8x128xf32>
    %79 = vector.extract_strided_slice %17 {offsets = [0, 10, 0], sizes = [8, 1, 64], strides = [1, 1, 1]} : vector<8x16x64xbf16> to vector<8x1x64xbf16>
    %80 = vector.shape_cast %79 : vector<8x1x64xbf16> to vector<8x64xbf16>
    %c10 = arith.constant 10 : index
    %c0_44 = arith.constant 0 : index
    %c0_45 = arith.constant 0 : index
    %81 = vector.load %arg6[%c10, %c0_44, %c0_45] : memref<16x64x128xbf16, #tpu.memory_space<vmem>>, vector<1x64x128xbf16>
    %82 = vector.shape_cast %81 : vector<1x64x128xbf16> to vector<64x128xbf16>
    %cst_46 = arith.constant dense<0.000000e+00> : vector<8x128xf32>
    %83 = tpu.matmul %80, %82, %cst_46 {dimension_numbers = #tpu.dot_dimension_numbers<[1], [0], [0], [1], [0, 0, 1, 1], [], []>} : vector<8x64xbf16>, vector<64x128xbf16>, vector<8x128xf32> -> vector<8x128xf32>
    %84 = arith.addf %78, %83 : vector<8x128xf32>
    %85 = vector.extract_strided_slice %17 {offsets = [0, 11, 0], sizes = [8, 1, 64], strides = [1, 1, 1]} : vector<8x16x64xbf16> to vector<8x1x64xbf16>
    %86 = vector.shape_cast %85 : vector<8x1x64xbf16> to vector<8x64xbf16>
    %c11 = arith.constant 11 : index
    %c0_47 = arith.constant 0 : index
    %c0_48 = arith.constant 0 : index
    %87 = vector.load %arg6[%c11, %c0_47, %c0_48] : memref<16x64x128xbf16, #tpu.memory_space<vmem>>, vector<1x64x128xbf16>
    %88 = vector.shape_cast %87 : vector<1x64x128xbf16> to vector<64x128xbf16>
    %cst_49 = arith.constant dense<0.000000e+00> : vector<8x128xf32>
    %89 = tpu.matmul %86, %88, %cst_49 {dimension_numbers = #tpu.dot_dimension_numbers<[1], [0], [0], [1], [0, 0, 1, 1], [], []>} : vector<8x64xbf16>, vector<64x128xbf16>, vector<8x128xf32> -> vector<8x128xf32>
    %90 = arith.addf %84, %89 : vector<8x128xf32>
    %91 = vector.extract_strided_slice %17 {offsets = [0, 12, 0], sizes = [8, 1, 64], strides = [1, 1, 1]} : vector<8x16x64xbf16> to vector<8x1x64xbf16>
    %92 = vector.shape_cast %91 : vector<8x1x64xbf16> to vector<8x64xbf16>
    %c12 = arith.constant 12 : index
    %c0_50 = arith.constant 0 : index
    %c0_51 = arith.constant 0 : index
    %93 = vector.load %arg6[%c12, %c0_50, %c0_51] : memref<16x64x128xbf16, #tpu.memory_space<vmem>>, vector<1x64x128xbf16>
    %94 = vector.shape_cast %93 : vector<1x64x128xbf16> to vector<64x128xbf16>
    %cst_52 = arith.constant dense<0.000000e+00> : vector<8x128xf32>
    %95 = tpu.matmul %92, %94, %cst_52 {dimension_numbers = #tpu.dot_dimension_numbers<[1], [0], [0], [1], [0, 0, 1, 1], [], []>} : vector<8x64xbf16>, vector<64x128xbf16>, vector<8x128xf32> -> vector<8x128xf32>
    %96 = arith.addf %90, %95 : vector<8x128xf32>
    %97 = vector.extract_strided_slice %17 {offsets = [0, 13, 0], sizes = [8, 1, 64], strides = [1, 1, 1]} : vector<8x16x64xbf16> to vector<8x1x64xbf16>
    %98 = vector.shape_cast %97 : vector<8x1x64xbf16> to vector<8x64xbf16>
    %c13 = arith.constant 13 : index
    %c0_53 = arith.constant 0 : index
    %c0_54 = arith.constant 0 : index
    %99 = vector.load %arg6[%c13, %c0_53, %c0_54] : memref<16x64x128xbf16, #tpu.memory_space<vmem>>, vector<1x64x128xbf16>
    %100 = vector.shape_cast %99 : vector<1x64x128xbf16> to vector<64x128xbf16>
    %cst_55 = arith.constant dense<0.000000e+00> : vector<8x128xf32>
    %101 = tpu.matmul %98, %100, %cst_55 {dimension_numbers = #tpu.dot_dimension_numbers<[1], [0], [0], [1], [0, 0, 1, 1], [], []>} : vector<8x64xbf16>, vector<64x128xbf16>, vector<8x128xf32> -> vector<8x128xf32>
    %102 = arith.addf %96, %101 : vector<8x128xf32>
    %103 = vector.extract_strided_slice %17 {offsets = [0, 14, 0], sizes = [8, 1, 64], strides = [1, 1, 1]} : vector<8x16x64xbf16> to vector<8x1x64xbf16>
    %104 = vector.shape_cast %103 : vector<8x1x64xbf16> to vector<8x64xbf16>
    %c14 = arith.constant 14 : index
    %c0_56 = arith.constant 0 : index
    %c0_57 = arith.constant 0 : index
    %105 = vector.load %arg6[%c14, %c0_56, %c0_57] : memref<16x64x128xbf16, #tpu.memory_space<vmem>>, vector<1x64x128xbf16>
    %106 = vector.shape_cast %105 : vector<1x64x128xbf16> to vector<64x128xbf16>
    %cst_58 = arith.constant dense<0.000000e+00> : vector<8x128xf32>
    %107 = tpu.matmul %104, %106, %cst_58 {dimension_numbers = #tpu.dot_dimension_numbers<[1], [0], [0], [1], [0, 0, 1, 1], [], []>} : vector<8x64xbf16>, vector<64x128xbf16>, vector<8x128xf32> -> vector<8x128xf32>
    %108 = arith.addf %102, %107 : vector<8x128xf32>
    %109 = vector.extract_strided_slice %17 {offsets = [0, 15, 0], sizes = [8, 1, 64], strides = [1, 1, 1]} : vector<8x16x64xbf16> to vector<8x1x64xbf16>
    %110 = vector.shape_cast %109 : vector<8x1x64xbf16> to vector<8x64xbf16>
    %c15 = arith.constant 15 : index
    %c0_59 = arith.constant 0 : index
    %c0_60 = arith.constant 0 : index
    %111 = vector.load %arg6[%c15, %c0_59, %c0_60] : memref<16x64x128xbf16, #tpu.memory_space<vmem>>, vector<1x64x128xbf16>
    %112 = vector.shape_cast %111 : vector<1x64x128xbf16> to vector<64x128xbf16>
    %cst_61 = arith.constant dense<0.000000e+00> : vector<8x128xf32>
    %113 = tpu.matmul %110, %112, %cst_61 {dimension_numbers = #tpu.dot_dimension_numbers<[1], [0], [0], [1], [0, 0, 1, 1], [], []>} : vector<8x64xbf16>, vector<64x128xbf16>, vector<8x128xf32> -> vector<8x128xf32>
    %114 = arith.addf %108, %113 : vector<8x128xf32>
    %c0_62 = arith.constant 0 : index
    %c0_63 = arith.constant 0 : index
    %115 = vector.load %arg7[%c0_62, %c0_63] : memref<1x128xf32, #tpu.memory_space<vmem>>, vector<1x128xf32>
    %116 = vector.broadcast %115 : vector<1x128xf32> to vector<8x128xf32>
    %117 = arith.addf %114, %116 : vector<8x128xf32>
    %cst_64 = arith.constant 0.000000e+00 : f32
    %118 = vector.broadcast %cst_64 : f32 to vector<8x128xf32>
    %119 = arith.maximumf %117, %118 : vector<8x128xf32>
    %120 = arith.truncf %119 : vector<8x128xf32> to vector<8x128xbf16>
    %c0_65 = arith.constant 0 : index
    %c0_66 = arith.constant 0 : index
    %121 = vector.load %arg8[%c0_65, %c0_66] : memref<128x128xbf16, #tpu.memory_space<vmem>>, vector<128x128xbf16>
    %cst_67 = arith.constant dense<0.000000e+00> : vector<8x128xf32>
    %122 = tpu.matmul %120, %121, %cst_67 {dimension_numbers = #tpu.dot_dimension_numbers<[1], [0], [0], [1], [0, 0, 1, 1], [], []>} : vector<8x128xbf16>, vector<128x128xbf16>, vector<8x128xf32> -> vector<8x128xf32>
    %c0_68 = arith.constant 0 : index
    %c0_69 = arith.constant 0 : index
    %123 = vector.load %arg9[%c0_68, %c0_69] : memref<1x128xf32, #tpu.memory_space<vmem>>, vector<1x128xf32>
    %124 = vector.broadcast %123 : vector<1x128xf32> to vector<8x128xf32>
    %125 = arith.addf %122, %124 : vector<8x128xf32>
    %126 = math.absf %125 : vector<8x128xf32>
    %cst_70 = arith.constant 0.000000e+00 : f32
    %127 = vector.broadcast %cst_70 : f32 to vector<8x128xf32>
    %128 = arith.subf %127, %126 : vector<8x128xf32>
    %129 = math.exp %128 : vector<8x128xf32>
    %cst_71 = arith.constant 1.000000e+00 : f32
    %130 = vector.broadcast %cst_71 : f32 to vector<8x128xf32>
    %131 = arith.addf %130, %129 : vector<8x128xf32>
    %132 = tpu.reciprocal %131 {approx = true} : vector<8x128xf32> -> vector<8x128xf32>
    %cst_72 = arith.constant 0.000000e+00 : f32
    %133 = vector.broadcast %cst_72 : f32 to vector<8x128xf32>
    %134 = arith.cmpf oge, %125, %133 : vector<8x128xf32>
    %cst_73 = arith.constant 1.000000e+00 : f32
    %135 = vector.broadcast %cst_73 : f32 to vector<8x128xf32>
    %136 = arith.subf %135, %132 : vector<8x128xf32>
    %137 = arith.select %134, %132, %136 : vector<8x128xi1>, vector<8x128xf32>
    %c0_74 = arith.constant 0 : index
    %c0_75 = arith.constant 0 : index
    %138 = vector.load %arg10[%c0_74, %c0_75] : memref<8x128xf32, #tpu.memory_space<vmem>>, vector<8x128xf32>
    tpu.vector_store %arg10[%c0_74, %c0_75], %137 {strides = array<i32>} : memref<8x128xf32, #tpu.memory_space<vmem>>, vector<8x128xf32>,
    return
  }
  func.func @transform_0(%arg0: i32) -> (i32, i32) {
    %c0_i32 = arith.constant 0 : i32
    %c0_i32_0 = arith.constant 0 : i32
    return %arg0, %c0_i32 : i32, i32
  }
  func.func @transform_1(%arg0: i32) -> (i32, i32) {
    %c0_i32 = arith.constant 0 : i32
    %c0_i32_0 = arith.constant 0 : i32
    %c0_i32_1 = arith.constant 0 : i32
    return %c0_i32, %c0_i32_0 : i32, i32
  }
  func.func @transform_2(%arg0: i32) -> (i32, i32) {
    %c0_i32 = arith.constant 0 : i32
    %c0_i32_0 = arith.constant 0 : i32
    %c0_i32_1 = arith.constant 0 : i32
    return %c0_i32, %c0_i32_0 : i32, i32
  }
  func.func @transform_3(%arg0: i32) -> (i32, i32) {
    %c0_i32 = arith.constant 0 : i32
    %c0_i32_0 = arith.constant 0 : i32
    %c0_i32_1 = arith.constant 0 : i32
    return %c0_i32, %c0_i32_0 : i32, i32
  }
  func.func @transform_4(%arg0: i32) -> (i32, i32) {
    %c0_i32 = arith.constant 0 : i32
    %c0_i32_0 = arith.constant 0 : i32
    %c0_i32_1 = arith.constant 0 : i32
    return %c0_i32, %c0_i32_0 : i32, i32
  }
  func.func @transform_5(%arg0: i32) -> (i32, i32, i32) {
    %c0_i32 = arith.constant 0 : i32
    %c0_i32_0 = arith.constant 0 : i32
    %c0_i32_1 = arith.constant 0 : i32
    %c0_i32_2 = arith.constant 0 : i32
    return %c0_i32, %c0_i32_0, %c0_i32_1 : i32, i32, i32
  }
  func.func @transform_6(%arg0: i32) -> (i32, i32) {
    %c0_i32 = arith.constant 0 : i32
    %c0_i32_0 = arith.constant 0 : i32
    %c0_i32_1 = arith.constant 0 : i32
    return %c0_i32, %c0_i32_0 : i32, i32
  }
  func.func @transform_7(%arg0: i32) -> (i32, i32) {
    %c0_i32 = arith.constant 0 : i32
    %c0_i32_0 = arith.constant 0 : i32
    %c0_i32_1 = arith.constant 0 : i32
    return %c0_i32, %c0_i32_0 : i32, i32
  }
  func.func @transform_8(%arg0: i32) -> (i32, i32) {
    %c0_i32 = arith.constant 0 : i32
    %c0_i32_0 = arith.constant 0 : i32
    %c0_i32_1 = arith.constant 0 : i32
    return %c0_i32, %c0_i32_0 : i32, i32
  }
  func.func @transform_9(%arg0: i32) -> (i32, i32) {
    %c0_i32 = arith.constant 0 : i32
    %c0_i32_0 = arith.constant 0 : i32
    return %arg0, %c0_i32 : i32, i32
  }
}

</mosaic_0001>

<llo_original>
// kernel: mnist_classifier_forward.1
$region0: #{mnist_classifier_forward.1}
  #allocation0 [shape = 'u32[]', space=smem, size = 0x4, offset = 0x4, fixed_abs, tag = 'smem constant byte address 0x4 - core index']
  #allocation1 [shape = 'u32[144,128]{1,0:T(1,128)}', space=vmem, size = 0x12000, scoped, tag = 'internal scratch']
  %s0 = inlined_call_operand.vmem [shape: bf16[128,256], index: 0, kind: input, shape index: {}]
  %s1 = inlined_call_operand.vmem [shape: bf16[256,512], index: 1, kind: input, shape index: {}]
  %s2 = inlined_call_operand.vmem [shape: f32[1,512], index: 2, kind: input, shape index: {}]
  %s3 = inlined_call_operand.vmem [shape: bf16[512,64], index: 3, kind: input, shape index: {}]
  %s4 = inlined_call_operand.vmem [shape: f32[1,64], index: 4, kind: input, shape index: {}]
  %s5 = inlined_call_operand.vmem [shape: bf16[16,64,128], index: 5, kind: input, shape index: {}]
  %s6 = inlined_call_operand.vmem [shape: f32[1,128], index: 6, kind: input, shape index: {}]
  %s7 = inlined_call_operand.vmem [shape: bf16[128,128], index: 7, kind: input, shape index: {}]
  %s8 = inlined_call_operand.vmem [shape: f32[1,128], index: 8, kind: input, shape index: {}]
  %s9 = inlined_call_operand.vmem [shape: f32[8,128], index: 9, kind: output, shape index: {}]
  %s10 = sld [smem:[#allocation0]]
  $region46: #{mnist_classifier_forward.1} parent=0
    _
  %s12 = ssub.s32 1, %s10
  %s13 = scalar_select 0, %s12, %s10
  // Predicated region
  $region2: #{mnist_classifier_forward.1} parent=0 // pred_check
    _
  $region3: #{mnist_classifier_forward.1} parent=0 // pred_check_branch
    %15 = sbr.rel (0) target = $region5
  $region4: #{mnist_classifier_forward.1} parent=0 // pred_region
    _
  $region5: #{mnist_classifier_forward.1} parent=0 // pred_fallthru
    _
  // Predicated region
  $region6: #{mnist_classifier_forward.1} parent=0 // pred_check
    _
  $region7: #{mnist_classifier_forward.1} parent=0 // pred_check_branch
    %17 = sbr.rel (0) target = $region9
  $region8: #{mnist_classifier_forward.1} parent=0 // pred_region
    _
  $region9: #{mnist_classifier_forward.1} parent=0 // pred_fallthru
    _
  // Predicated region
  $region10: #{mnist_classifier_forward.1} parent=0 // pred_check
    _
  $region11: #{mnist_classifier_forward.1} parent=0 // pred_check_branch
    %19 = sbr.rel (0) target = $region13
  $region12: #{mnist_classifier_forward.1} parent=0 // pred_region
    _
  $region13: #{mnist_classifier_forward.1} parent=0 // pred_fallthru
    _
  // Predicated region
  $region14: #{mnist_classifier_forward.1} parent=0 // pred_check
    _
  $region15: #{mnist_classifier_forward.1} parent=0 // pred_check_branch
    %21 = sbr.rel (0) target = $region17
  $region16: #{mnist_classifier_forward.1} parent=0 // pred_region
    _
  $region17: #{mnist_classifier_forward.1} parent=0 // pred_fallthru
    _
  // Predicated region
  $region18: #{mnist_classifier_forward.1} parent=0 // pred_check
    _
  $region19: #{mnist_classifier_forward.1} parent=0 // pred_check_branch
    %23 = sbr.rel (0) target = $region21
  $region20: #{mnist_classifier_forward.1} parent=0 // pred_region
    _
  $region21: #{mnist_classifier_forward.1} parent=0 // pred_fallthru
    _
  // Predicated region
  $region22: #{mnist_classifier_forward.1} parent=0 // pred_check
    _
  $region23: #{mnist_classifier_forward.1} parent=0 // pred_check_branch
    %25 = sbr.rel (0) target = $region25
  $region24: #{mnist_classifier_forward.1} parent=0 // pred_region
    _
  $region25: #{mnist_classifier_forward.1} parent=0 // pred_fallthru
    _
  // Predicated region
  $region26: #{mnist_classifier_forward.1} parent=0 // pred_check
    _
  $region27: #{mnist_classifier_forward.1} parent=0 // pred_check_branch
    %27 = sbr.rel (0) target = $region29
  $region28: #{mnist_classifier_forward.1} parent=0 // pred_region
    _
  $region29: #{mnist_classifier_forward.1} parent=0 // pred_fallthru
    _
  // Predicated region
  $region30: #{mnist_classifier_forward.1} parent=0 // pred_check
    _
  $region31: #{mnist_classifier_forward.1} parent=0 // pred_check_branch
    %29 = sbr.rel (0) target = $region33
  $region32: #{mnist_classifier_forward.1} parent=0 // pred_region
    _
  $region33: #{mnist_classifier_forward.1} parent=0 // pred_fallthru
    _
  // Predicated region
  $region34: #{mnist_classifier_forward.1} parent=0 // pred_check
    _
  $region35: #{mnist_classifier_forward.1} parent=0 // pred_check_branch
    %31 = sbr.rel (0) target = $region37
  $region36: #{mnist_classifier_forward.1} parent=0 // pred_region
    _
  $region37: #{mnist_classifier_forward.1} parent=0 // pred_fallthru
    _
  %v33 = vld [vmem:[%s0] sm:$0xff]
  %v34 = vld [vmem:[%s0 + $0x8] sm:$0xff]
  %v35 = vld [vmem:[%s0 + $0x10] sm:$0xff]
  %v36 = vld [vmem:[%s0 + $0x18] sm:$0xff]
  %v37 = vld [vmem:[%s0 + $0x20] sm:$0xff]
  %v38 = vld [vmem:[%s0 + $0x28] sm:$0xff]
  %v39 = vld [vmem:[%s0 + $0x30] sm:$0xff]
  %v40 = vld [vmem:[%s0 + $0x38] sm:$0xff]
  %v41 = vld [vmem:[%s0 + $0x40] sm:$0xff]
  %v42 = vld [vmem:[%s0 + $0x48] sm:$0xff]
  %v43 = vld [vmem:[%s0 + $0x50] sm:$0xff]
  %v44 = vld [vmem:[%s0 + $0x58] sm:$0xff]
  %v45 = vld [vmem:[%s0 + $0x60] sm:$0xff]
  %v46 = vld [vmem:[%s0 + $0x68] sm:$0xff]
  %v47 = vld [vmem:[%s0 + $0x70] sm:$0xff]
  %v48 = vld [vmem:[%s0 + $0x78] sm:$0xff]
  %v49 = vld [vmem:[%s1] sm:$0xff]
  %v50 = vld [vmem:[%s1 + $0x8] sm:$0xff]
  %v51 = vld [vmem:[%s1 + $0x10] sm:$0xff]
  %v52 = vld [vmem:[%s1 + $0x18] sm:$0xff]
  %v53 = vld [vmem:[%s1 + $0x20] sm:$0xff]
  %v54 = vld [vmem:[%s1 + $0x28] sm:$0xff]
  %v55 = vld [vmem:[%s1 + $0x30] sm:$0xff]
  %v56 = vld [vmem:[%s1 + $0x38] sm:$0xff]
  %v57 = vld [vmem:[%s1 + $0x40] sm:$0xff]
  %v58 = vld [vmem:[%s1 + $0x48] sm:$0xff]
  %v59 = vld [vmem:[%s1 + $0x50] sm:$0xff]
  %v60 = vld [vmem:[%s1 + $0x58] sm:$0xff]
  %v61 = vld [vmem:[%s1 + $0x60] sm:$0xff]
  %v62 = vld [vmem:[%s1 + $0x68] sm:$0xff]
  %v63 = vld [vmem:[%s1 + $0x70] sm:$0xff]
  %v64 = vld [vmem:[%s1 + $0x78] sm:$0xff]
  %v65 = vld [vmem:[%s1 + $0x80] sm:$0xff]
  %v66 = vld [vmem:[%s1 + $0x88] sm:$0xff]
  %v67 = vld [vmem:[%s1 + $0x90] sm:$0xff]
  %v68 = vld [vmem:[%s1 + $0x98] sm:$0xff]
  %v69 = vld [vmem:[%s1 + $0xa0] sm:$0xff]
  %v70 = vld [vmem:[%s1 + $0xa8] sm:$0xff]
  %v71 = vld [vmem:[%s1 + $0xb0] sm:$0xff]
  %v72 = vld [vmem:[%s1 + $0xb8] sm:$0xff]
  %v73 = vld [vmem:[%s1 + $0xc0] sm:$0xff]
  %v74 = vld [vmem:[%s1 + $0xc8] sm:$0xff]
  %v75 = vld [vmem:[%s1 + $0xd0] sm:$0xff]
  %v76 = vld [vmem:[%s1 + $0xd8] sm:$0xff]
  %v77 = vld [vmem:[%s1 + $0xe0] sm:$0xff]
  %v78 = vld [vmem:[%s1 + $0xe8] sm:$0xff]
  %v79 = vld [vmem:[%s1 + $0xf0] sm:$0xff]
  %v80 = vld [vmem:[%s1 + $0xf8] sm:$0xff]
  %v81 = vld [vmem:[%s1 + $0x100] sm:$0xff]
  %v82 = vld [vmem:[%s1 + $0x108] sm:$0xff]
  %v83 = vld [vmem:[%s1 + $0x110] sm:$0xff]
  %v84 = vld [vmem:[%s1 + $0x118] sm:$0xff]
  %v85 = vld [vmem:[%s1 + $0x120] sm:$0xff]
  %v86 = vld [vmem:[%s1 + $0x128] sm:$0xff]
  %v87 = vld [vmem:[%s1 + $0x130] sm:$0xff]
  %v88 = vld [vmem:[%s1 + $0x138] sm:$0xff]
  %v89 = vld [vmem:[%s1 + $0x140] sm:$0xff]
  %v90 = vld [vmem:[%s1 + $0x148] sm:$0xff]
  %v91 = vld [vmem:[%s1 + $0x150] sm:$0xff]
  %v92 = vld [vmem:[%s1 + $0x158] sm:$0xff]
  %v93 = vld [vmem:[%s1 + $0x160] sm:$0xff]
  %v94 = vld [vmem:[%s1 + $0x168] sm:$0xff]
  %v95 = vld [vmem:[%s1 + $0x170] sm:$0xff]
  %v96 = vld [vmem:[%s1 + $0x178] sm:$0xff]
  %v97 = vld [vmem:[%s1 + $0x180] sm:$0xff]
  %v98 = vld [vmem:[%s1 + $0x188] sm:$0xff]
  %v99 = vld [vmem:[%s1 + $0x190] sm:$0xff]
  %v100 = vld [vmem:[%s1 + $0x198] sm:$0xff]
  %v101 = vld [vmem:[%s1 + $0x1a0] sm:$0xff]
  %v102 = vld [vmem:[%s1 + $0x1a8] sm:$0xff]
  %v103 = vld [vmem:[%s1 + $0x1b0] sm:$0xff]
  %v104 = vld [vmem:[%s1 + $0x1b8] sm:$0xff]
  %v105 = vld [vmem:[%s1 + $0x1c0] sm:$0xff]
  %v106 = vld [vmem:[%s1 + $0x1c8] sm:$0xff]
  %v107 = vld [vmem:[%s1 + $0x1d0] sm:$0xff]
  %v108 = vld [vmem:[%s1 + $0x1d8] sm:$0xff]
  %v109 = vld [vmem:[%s1 + $0x1e0] sm:$0xff]
  %v110 = vld [vmem:[%s1 + $0x1e8] sm:$0xff]
  %v111 = vld [vmem:[%s1 + $0x1f0] sm:$0xff]
  %v112 = vld [vmem:[%s1 + $0x1f8] sm:$0xff]
  %v113 = vld [vmem:[%s2] sm:$0xf]
  %v115 = vlaneseq
  %v116 = vshrl.u32 %v115, 7
  %v117 = vsub.s32 0, %v116
  %v118 = vrot.slane %v113, %v117
  %v119 = vlaneseq
  %v120 = vshrl.u32 %v119, 7
  %v121 = vsub.s32 1, %v120
  %v122 = vrot.slane %v113, %v121
  %v123 = vlaneseq
  %v124 = vshrl.u32 %v123, 7
  %v125 = vsub.s32 2, %v124
  %v126 = vrot.slane %v113, %v125
  %v127 = vlaneseq
  %v128 = vshrl.u32 %v127, 7
  %v129 = vsub.s32 3, %v128
  %v130 = vrot.slane %v113, %v129
  %v151 = vunpack.c.l.b16 %v33
  %v152 = vunpack.c.h.b16 %v33
  %v153 = vunpack.c.l.b16 %v34
  %v154 = vunpack.c.h.b16 %v34
  %v155 = vunpack.c.l.b16 %v35
  %v156 = vunpack.c.h.b16 %v35
  %v157 = vunpack.c.l.b16 %v36
  %v158 = vunpack.c.h.b16 %v36
  %v159 = vunpack.c.l.b16 %v37
  %v160 = vunpack.c.h.b16 %v37
  %v161 = vunpack.c.l.b16 %v38
  %v162 = vunpack.c.h.b16 %v38
  %v163 = vunpack.c.l.b16 %v39
  %v164 = vunpack.c.h.b16 %v39
  %v165 = vunpack.c.l.b16 %v40
  %v166 = vunpack.c.h.b16 %v40
  %v167 = vunpack.c.l.b16 %v41
  %v168 = vunpack.c.h.b16 %v41
  %v169 = vunpack.c.l.b16 %v42
  %v170 = vunpack.c.h.b16 %v42
  %v171 = vunpack.c.l.b16 %v43
  %v172 = vunpack.c.h.b16 %v43
  %v173 = vunpack.c.l.b16 %v44
  %v174 = vunpack.c.h.b16 %v44
  %v175 = vunpack.c.l.b16 %v45
  %v176 = vunpack.c.h.b16 %v45
  %v177 = vunpack.c.l.b16 %v46
  %v178 = vunpack.c.h.b16 %v46
  %v179 = vunpack.c.l.b16 %v47
  %v180 = vunpack.c.h.b16 %v47
  %v181 = vunpack.c.l.b16 %v48
  %v182 = vunpack.c.h.b16 %v48
  %v183 = vpack.c.b16 %v153, %v151
  %v184 = vpack.c.b16 %v154, %v152
  %v185 = vpack.c.b16 %v157, %v155
  %v186 = vpack.c.b16 %v158, %v156
  %v187 = vpack.c.b16 %v161, %v159
  %v188 = vpack.c.b16 %v162, %v160
  %v189 = vpack.c.b16 %v165, %v163
  %v190 = vpack.c.b16 %v166, %v164
  %v191 = vpack.c.b16 %v169, %v167
  %v192 = vpack.c.b16 %v170, %v168
  %v193 = vpack.c.b16 %v173, %v171
  %v194 = vpack.c.b16 %v174, %v172
  %v195 = vpack.c.b16 %v177, %v175
  %v196 = vpack.c.b16 %v178, %v176
  %v197 = vpack.c.b16 %v181, %v179
  %v198 = vpack.c.b16 %v182, %v180
  %v279 = vunpack.c.l.b16 %v49
  %v280 = vunpack.c.h.b16 %v49
  %v281 = vunpack.c.l.b16 %v50
  %v282 = vunpack.c.h.b16 %v50
  %v283 = vunpack.c.l.b16 %v51
  %v284 = vunpack.c.h.b16 %v51
  %v285 = vunpack.c.l.b16 %v52
  %v286 = vunpack.c.h.b16 %v52
  %v287 = vunpack.c.l.b16 %v53
  %v288 = vunpack.c.h.b16 %v53
  %v289 = vunpack.c.l.b16 %v54
  %v290 = vunpack.c.h.b16 %v54
  %v291 = vunpack.c.l.b16 %v55
  %v292 = vunpack.c.h.b16 %v55
  %v293 = vunpack.c.l.b16 %v56
  %v294 = vunpack.c.h.b16 %v56
  %v295 = vunpack.c.l.b16 %v57
  %v296 = vunpack.c.h.b16 %v57
  %v297 = vunpack.c.l.b16 %v58
  %v298 = vunpack.c.h.b16 %v58
  %v299 = vunpack.c.l.b16 %v59
  %v300 = vunpack.c.h.b16 %v59
  %v301 = vunpack.c.l.b16 %v60
  %v302 = vunpack.c.h.b16 %v60
  %v303 = vunpack.c.l.b16 %v61
  %v304 = vunpack.c.h.b16 %v61
  %v305 = vunpack.c.l.b16 %v62
  %v306 = vunpack.c.h.b16 %v62
  %v307 = vunpack.c.l.b16 %v63
  %v308 = vunpack.c.h.b16 %v63
  %v309 = vunpack.c.l.b16 %v64
  %v310 = vunpack.c.h.b16 %v64
  %v311 = vunpack.c.l.b16 %v65
  %v312 = vunpack.c.h.b16 %v65
  %v313 = vunpack.c.l.b16 %v66
  %v314 = vunpack.c.h.b16 %v66
  %v315 = vunpack.c.l.b16 %v67
  %v316 = vunpack.c.h.b16 %v67
  %v317 = vunpack.c.l.b16 %v68
  %v318 = vunpack.c.h.b16 %v68
  %v319 = vunpack.c.l.b16 %v69
  %v320 = vunpack.c.h.b16 %v69
  %v321 = vunpack.c.l.b16 %v70
  %v322 = vunpack.c.h.b16 %v70
  %v323 = vunpack.c.l.b16 %v71
  %v324 = vunpack.c.h.b16 %v71
  %v325 = vunpack.c.l.b16 %v72
  %v326 = vunpack.c.h.b16 %v72
  %v327 = vunpack.c.l.b16 %v73
  %v328 = vunpack.c.h.b16 %v73
  %v329 = vunpack.c.l.b16 %v74
  %v330 = vunpack.c.h.b16 %v74
  %v331 = vunpack.c.l.b16 %v75
  %v332 = vunpack.c.h.b16 %v75
  %v333 = vunpack.c.l.b16 %v76
  %v334 = vunpack.c.h.b16 %v76
  %v335 = vunpack.c.l.b16 %v77
  %v336 = vunpack.c.h.b16 %v77
  %v337 = vunpack.c.l.b16 %v78
  %v338 = vunpack.c.h.b16 %v78
  %v339 = vunpack.c.l.b16 %v79
  %v340 = vunpack.c.h.b16 %v79
  %v341 = vunpack.c.l.b16 %v80
  %v342 = vunpack.c.h.b16 %v80
  %v343 = vunpack.c.l.b16 %v81
  %v344 = vunpack.c.h.b16 %v81
  %v345 = vunpack.c.l.b16 %v82
  %v346 = vunpack.c.h.b16 %v82
  %v347 = vunpack.c.l.b16 %v83
  %v348 = vunpack.c.h.b16 %v83
  %v349 = vunpack.c.l.b16 %v84
  %v350 = vunpack.c.h.b16 %v84
  %v351 = vunpack.c.l.b16 %v85
  %v352 = vunpack.c.h.b16 %v85
  %v353 = vunpack.c.l.b16 %v86
  %v354 = vunpack.c.h.b16 %v86
  %v355 = vunpack.c.l.b16 %v87
  %v356 = vunpack.c.h.b16 %v87
  %v357 = vunpack.c.l.b16 %v88
  %v358 = vunpack.c.h.b16 %v88
  %v359 = vunpack.c.l.b16 %v89
  %v360 = vunpack.c.h.b16 %v89
  %v361 = vunpack.c.l.b16 %v90
  %v362 = vunpack.c.h.b16 %v90
  %v363 = vunpack.c.l.b16 %v91
  %v364 = vunpack.c.h.b16 %v91
  %v365 = vunpack.c.l.b16 %v92
  %v366 = vunpack.c.h.b16 %v92
  %v367 = vunpack.c.l.b16 %v93
  %v368 = vunpack.c.h.b16 %v93
  %v369 = vunpack.c.l.b16 %v94
  %v370 = vunpack.c.h.b16 %v94
  %v371 = vunpack.c.l.b16 %v95
  %v372 = vunpack.c.h.b16 %v95
  %v373 = vunpack.c.l.b16 %v96
  %v374 = vunpack.c.h.b16 %v96
  %v375 = vunpack.c.l.b16 %v97
  %v376 = vunpack.c.h.b16 %v97
  %v377 = vunpack.c.l.b16 %v98
  %v378 = vunpack.c.h.b16 %v98
  %v379 = vunpack.c.l.b16 %v99
  %v380 = vunpack.c.h.b16 %v99
  %v381 = vunpack.c.l.b16 %v100
  %v382 = vunpack.c.h.b16 %v100
  %v383 = vunpack.c.l.b16 %v101
  %v384 = vunpack.c.h.b16 %v101
  %v385 = vunpack.c.l.b16 %v102
  %v386 = vunpack.c.h.b16 %v102
  %v387 = vunpack.c.l.b16 %v103
  %v388 = vunpack.c.h.b16 %v103
  %v389 = vunpack.c.l.b16 %v104
  %v390 = vunpack.c.h.b16 %v104
  %v391 = vunpack.c.l.b16 %v105
  %v392 = vunpack.c.h.b16 %v105
  %v393 = vunpack.c.l.b16 %v106
  %v394 = vunpack.c.h.b16 %v106
  %v395 = vunpack.c.l.b16 %v107
  %v396 = vunpack.c.h.b16 %v107
  %v397 = vunpack.c.l.b16 %v108
  %v398 = vunpack.c.h.b16 %v108
  %v399 = vunpack.c.l.b16 %v109
  %v400 = vunpack.c.h.b16 %v109
  %v401 = vunpack.c.l.b16 %v110
  %v402 = vunpack.c.h.b16 %v110
  %v403 = vunpack.c.l.b16 %v111
  %v404 = vunpack.c.h.b16 %v111
  %v405 = vunpack.c.l.b16 %v112
  %v406 = vunpack.c.h.b16 %v112
  %v407 = vpack.c.b16 %v283, %v279
  %v408 = vpack.c.b16 %v284, %v280
  %v409 = vpack.c.b16 %v285, %v281
  %v410 = vpack.c.b16 %v286, %v282
  %v411 = vpack.c.b16 %v291, %v287
  %v412 = vpack.c.b16 %v292, %v288
  %v413 = vpack.c.b16 %v293, %v289
  %v414 = vpack.c.b16 %v294, %v290
  %v415 = vpack.c.b16 %v299, %v295
  %v416 = vpack.c.b16 %v300, %v296
  %v417 = vpack.c.b16 %v301, %v297
  %v418 = vpack.c.b16 %v302, %v298
  %v419 = vpack.c.b16 %v307, %v303
  %v420 = vpack.c.b16 %v308, %v304
  %v421 = vpack.c.b16 %v309, %v305
  %v422 = vpack.c.b16 %v310, %v306
  %v423 = vpack.c.b16 %v315, %v311
  %v424 = vpack.c.b16 %v316, %v312
  %v425 = vpack.c.b16 %v317, %v313
  %v426 = vpack.c.b16 %v318, %v314
  %v427 = vpack.c.b16 %v323, %v319
  %v428 = vpack.c.b16 %v324, %v320
  %v429 = vpack.c.b16 %v325, %v321
  %v430 = vpack.c.b16 %v326, %v322
  %v431 = vpack.c.b16 %v331, %v327
  %v432 = vpack.c.b16 %v332, %v328
  %v433 = vpack.c.b16 %v333, %v329
  %v434 = vpack.c.b16 %v334, %v330
  %v435 = vpack.c.b16 %v339, %v335
  %v436 = vpack.c.b16 %v340, %v336
  %v437 = vpack.c.b16 %v341, %v337
  %v438 = vpack.c.b16 %v342, %v338
  %v439 = vpack.c.b16 %v347, %v343
  %v440 = vpack.c.b16 %v348, %v344
  %v441 = vpack.c.b16 %v349, %v345
  %v442 = vpack.c.b16 %v350, %v346
  %v443 = vpack.c.b16 %v355, %v351
  %v444 = vpack.c.b16 %v356, %v352
  %v445 = vpack.c.b16 %v357, %v353
  %v446 = vpack.c.b16 %v358, %v354
  %v447 = vpack.c.b16 %v363, %v359
  %v448 = vpack.c.b16 %v364, %v360
  %v449 = vpack.c.b16 %v365, %v361
  %v450 = vpack.c.b16 %v366, %v362
  %v451 = vpack.c.b16 %v371, %v367
  %v452 = vpack.c.b16 %v372, %v368
  %v453 = vpack.c.b16 %v373, %v369
  %v454 = vpack.c.b16 %v374, %v370
  %v455 = vpack.c.b16 %v379, %v375
  %v456 = vpack.c.b16 %v380, %v376
  %v457 = vpack.c.b16 %v381, %v377
  %v458 = vpack.c.b16 %v382, %v378
  %v459 = vpack.c.b16 %v387, %v383
  %v460 = vpack.c.b16 %v388, %v384
  %v461 = vpack.c.b16 %v389, %v385
  %v462 = vpack.c.b16 %v390, %v386
  %v463 = vpack.c.b16 %v395, %v391
  %v464 = vpack.c.b16 %v396, %v392
  %v465 = vpack.c.b16 %v397, %v393
  %v466 = vpack.c.b16 %v398, %v394
  %v467 = vpack.c.b16 %v403, %v399
  %v468 = vpack.c.b16 %v404, %v400
  %v469 = vpack.c.b16 %v405, %v401
  %v470 = vpack.c.b16 %v406, %v402
  %535 = vmatprep.subr.bf16.mxu0 %v408
  %536 = vmatpush1.bf16.msra.mxu0 %v407
  %537 = vmatprep.subr.bf16.mxu0 %v412
  %538 = vmatpush1.bf16.msra.mxu0 %v411
  %539 = vmatprep.subr.bf16.mxu0 %v416
  %540 = vmatpush1.bf16.msra.mxu0 %v415
  %541 = vmatprep.subr.bf16.mxu0 %v420
  %542 = vmatpush1.bf16.msra.mxu0 %v419
  %543 = vmatprep.subr.bf16.mxu0 %v424
  %544 = vmatpush1.bf16.msra.mxu0 %v423
  %545 = vmatprep.subr.bf16.mxu0 %v428
  %546 = vmatpush1.bf16.msra.mxu0 %v427
  %547 = vmatprep.subr.bf16.mxu0 %v432
  %548 = vmatpush1.bf16.msra.mxu0 %v431
  %549 = vmatprep.subr.bf16.mxu0 %v436
  %550 = vmatpush1.bf16.msra.mxu0 %v435
  %551 = vmatprep.subr.bf16.mxu0 %v440
  %552 = vmatpush1.bf16.msra.mxu0 %v439
  %553 = vmatprep.subr.bf16.mxu0 %v444
  %554 = vmatpush1.bf16.msra.mxu0 %v443
  %555 = vmatprep.subr.bf16.mxu0 %v448
  %556 = vmatpush1.bf16.msra.mxu0 %v447
  %557 = vmatprep.subr.bf16.mxu0 %v452
  %558 = vmatpush1.bf16.msra.mxu0 %v451
  %559 = vmatprep.subr.bf16.mxu0 %v456
  %560 = vmatpush1.bf16.msra.mxu0 %v455
  %561 = vmatprep.subr.bf16.mxu0 %v460
  %562 = vmatpush1.bf16.msra.mxu0 %v459
  %563 = vmatprep.subr.bf16.mxu0 %v464
  %564 = vmatpush1.bf16.msra.mxu0 %v463
  %565 = vmatprep.subr.bf16.mxu0 %v468
  %566 = vmatpush1.bf16.msra.mxu0 %v467
  %567 = vmatprep.mubr.bf16.mxu0 %v184
  %568 = vmatmul.mubr.bf16.gmra.mrb[0].mxu0 %v183
  %v569 = vpop.f32.mrb[0].mxu0
  %v570 = vadd.f32 %v118, %v569
  %v571 = vpop.f32.mrb[0].mxu0
  %v572 = vadd.f32 %v122, %v571
  %v573 = vpop.f32.mrb[0].mxu0
  %v574 = vadd.f32 %v118, %v573
  %v575 = vpop.f32.mrb[0].mxu0
  %v576 = vadd.f32 %v122, %v575
  %577 = vmatprep.mubr.bf16.mxu0 %v186
  %578 = vmatmul.mubr.bf16.gmra.mrb[0].mxu0 %v185
  %v579 = vpop.f32.mrb[0].mxu0
  %v580 = vadd.f32 %v118, %v579
  %v581 = vpop.f32.mrb[0].mxu0
  %v582 = vadd.f32 %v122, %v581
  %v583 = vpop.f32.mrb[0].mxu0
  %v584 = vadd.f32 %v118, %v583
  %v585 = vpop.f32.mrb[0].mxu0
  %v586 = vadd.f32 %v122, %v585
  %587 = vmatprep.mubr.bf16.mxu0 %v188
  %588 = vmatmul.mubr.bf16.gmra.mrb[0].mxu0 %v187
  %v589 = vpop.f32.mrb[0].mxu0
  %v590 = vadd.f32 %v118, %v589
  %v591 = vpop.f32.mrb[0].mxu0
  %v592 = vadd.f32 %v122, %v591
  %v593 = vpop.f32.mrb[0].mxu0
  %v594 = vadd.f32 %v118, %v593
  %v595 = vpop.f32.mrb[0].mxu0
  %v596 = vadd.f32 %v122, %v595
  %597 = vmatprep.mubr.bf16.mxu0 %v190
  %598 = vmatmul.mubr.bf16.gmra.mrb[0].mxu0 %v189
  %v599 = vpop.f32.mrb[0].mxu0
  %v600 = vadd.f32 %v118, %v599
  %v601 = vpop.f32.mrb[0].mxu0
  %v602 = vadd.f32 %v122, %v601
  %v603 = vpop.f32.mrb[0].mxu0
  %v604 = vadd.f32 %v118, %v603
  %v605 = vpop.f32.mrb[0].mxu0
  %v606 = vadd.f32 %v122, %v605
  %607 = vmatprep.mubr.bf16.mxu0 %v192
  %608 = vmatmul.mubr.bf16.gmra.mrb[0].mxu0 %v191
  %v609 = vpop.f32.mrb[0].mxu0
  %v610 = vadd.f32 %v118, %v609
  %v611 = vpop.f32.mrb[0].mxu0
  %v612 = vadd.f32 %v122, %v611
  %v613 = vpop.f32.mrb[0].mxu0
  %v614 = vadd.f32 %v118, %v613
  %v615 = vpop.f32.mrb[0].mxu0
  %v616 = vadd.f32 %v122, %v615
  %617 = vmatprep.mubr.bf16.mxu0 %v194
  %618 = vmatmul.mubr.bf16.gmra.mrb[0].mxu0 %v193
  %v619 = vpop.f32.mrb[0].mxu0
  %v620 = vadd.f32 %v118, %v619
  %v621 = vpop.f32.mrb[0].mxu0
  %v622 = vadd.f32 %v122, %v621
  %v623 = vpop.f32.mrb[0].mxu0
  %v624 = vadd.f32 %v118, %v623
  %v625 = vpop.f32.mrb[0].mxu0
  %v626 = vadd.f32 %v122, %v625
  %627 = vmatprep.mubr.bf16.mxu0 %v196
  %628 = vmatmul.mubr.bf16.gmra.mrb[0].mxu0 %v195
  %v629 = vpop.f32.mrb[0].mxu0
  %v630 = vadd.f32 %v118, %v629
  %v631 = vpop.f32.mrb[0].mxu0
  %v632 = vadd.f32 %v122, %v631
  %v633 = vpop.f32.mrb[0].mxu0
  %v634 = vadd.f32 %v118, %v633
  %v635 = vpop.f32.mrb[0].mxu0
  %v636 = vadd.f32 %v122, %v635
  %637 = vmatprep.mubr.bf16.mxu0 %v198
  %638 = vmatmul.mubr.bf16.gmra.mrb[0].mxu0 %v197
  %v639 = vpop.f32.mrb[0].mxu0
  %v640 = vadd.f32 %v118, %v639
  %v641 = vpop.f32.mrb[0].mxu0
  %v642 = vadd.f32 %v122, %v641
  %v643 = vpop.f32.mrb[0].mxu0
  %v644 = vadd.f32 %v118, %v643
  %v645 = vpop.f32.mrb[0].mxu0
  %v646 = vadd.f32 %v122, %v645
  %647 = vdwg.mxu0
  %648 = vmatprep.subr.bf16.mxu0 %v410
  %649 = vmatpush1.bf16.msra.mxu0 %v409
  %650 = vmatprep.subr.bf16.mxu0 %v414
  %651 = vmatpush1.bf16.msra.mxu0 %v413
  %652 = vmatprep.subr.bf16.mxu0 %v418
  %653 = vmatpush1.bf16.msra.mxu0 %v417
  %654 = vmatprep.subr.bf16.mxu0 %v422
  %655 = vmatpush1.bf16.msra.mxu0 %v421
  %656 = vmatprep.subr.bf16.mxu0 %v426
  %657 = vmatpush1.bf16.msra.mxu0 %v425
  %658 = vmatprep.subr.bf16.mxu0 %v430
  %659 = vmatpush1.bf16.msra.mxu0 %v429
  %660 = vmatprep.subr.bf16.mxu0 %v434
  %661 = vmatpush1.bf16.msra.mxu0 %v433
  %662 = vmatprep.subr.bf16.mxu0 %v438
  %663 = vmatpush1.bf16.msra.mxu0 %v437
  %664 = vmatprep.subr.bf16.mxu0 %v442
  %665 = vmatpush1.bf16.msra.mxu0 %v441
  %666 = vmatprep.subr.bf16.mxu0 %v446
  %667 = vmatpush1.bf16.msra.mxu0 %v445
  %668 = vmatprep.subr.bf16.mxu0 %v450
  %669 = vmatpush1.bf16.msra.mxu0 %v449
  %670 = vmatprep.subr.bf16.mxu0 %v454
  %671 = vmatpush1.bf16.msra.mxu0 %v453
  %672 = vmatprep.subr.bf16.mxu0 %v458
  %673 = vmatpush1.bf16.msra.mxu0 %v457
  %674 = vmatprep.subr.bf16.mxu0 %v462
  %675 = vmatpush1.bf16.msra.mxu0 %v461
  %676 = vmatprep.subr.bf16.mxu0 %v466
  %677 = vmatpush1.bf16.msra.mxu0 %v465
  %678 = vmatprep.subr.bf16.mxu0 %v470
  %679 = vmatpush1.bf16.msra.mxu0 %v469
  %680 = vmatprep.mubr.bf16.mxu0 %v184
  %681 = vmatmul.mubr.bf16.gmra.mrb[0].mxu0 %v183
  %v682 = vpop.f32.mrb[0].mxu0
  %v683 = vadd.f32 %v126, %v682
  %v684 = vpop.f32.mrb[0].mxu0
  %v685 = vadd.f32 %v130, %v684
  %v686 = vpop.f32.mrb[0].mxu0
  %v687 = vadd.f32 %v126, %v686
  %v688 = vpop.f32.mrb[0].mxu0
  %v689 = vadd.f32 %v130, %v688
  %690 = vmatprep.mubr.bf16.mxu0 %v186
  %691 = vmatmul.mubr.bf16.gmra.mrb[0].mxu0 %v185
  %v692 = vpop.f32.mrb[0].mxu0
  %v693 = vadd.f32 %v126, %v692
  %v694 = vpop.f32.mrb[0].mxu0
  %v695 = vadd.f32 %v130, %v694
  %v696 = vpop.f32.mrb[0].mxu0
  %v697 = vadd.f32 %v126, %v696
  %v698 = vpop.f32.mrb[0].mxu0
  %v699 = vadd.f32 %v130, %v698
  %700 = vmatprep.mubr.bf16.mxu0 %v188
  %701 = vmatmul.mubr.bf16.gmra.mrb[0].mxu0 %v187
  %v702 = vpop.f32.mrb[0].mxu0
  %v703 = vadd.f32 %v126, %v702
  %v704 = vpop.f32.mrb[0].mxu0
  %v705 = vadd.f32 %v130, %v704
  %v706 = vpop.f32.mrb[0].mxu0
  %v707 = vadd.f32 %v126, %v706
  %v708 = vpop.f32.mrb[0].mxu0
  %v709 = vadd.f32 %v130, %v708
  %710 = vmatprep.mubr.bf16.mxu0 %v190
  %711 = vmatmul.mubr.bf16.gmra.mrb[0].mxu0 %v189
  %v712 = vpop.f32.mrb[0].mxu0
  %v713 = vadd.f32 %v126, %v712
  %v714 = vpop.f32.mrb[0].mxu0
  %v715 = vadd.f32 %v130, %v714
  %v716 = vpop.f32.mrb[0].mxu0
  %v717 = vadd.f32 %v126, %v716
  %v718 = vpop.f32.mrb[0].mxu0
  %v719 = vadd.f32 %v130, %v718
  %720 = vmatprep.mubr.bf16.mxu0 %v192
  %721 = vmatmul.mubr.bf16.gmra.mrb[0].mxu0 %v191
  %v722 = vpop.f32.mrb[0].mxu0
  %v723 = vadd.f32 %v126, %v722
  %v724 = vpop.f32.mrb[0].mxu0
  %v725 = vadd.f32 %v130, %v724
  %v726 = vpop.f32.mrb[0].mxu0
  %v727 = vadd.f32 %v126, %v726
  %v728 = vpop.f32.mrb[0].mxu0
  %v729 = vadd.f32 %v130, %v728
  %730 = vmatprep.mubr.bf16.mxu0 %v194
  %731 = vmatmul.mubr.bf16.gmra.mrb[0].mxu0 %v193
  %v732 = vpop.f32.mrb[0].mxu0
  %v733 = vadd.f32 %v126, %v732
  %v734 = vpop.f32.mrb[0].mxu0
  %v735 = vadd.f32 %v130, %v734
  %v736 = vpop.f32.mrb[0].mxu0
  %v737 = vadd.f32 %v126, %v736
  %v738 = vpop.f32.mrb[0].mxu0
  %v739 = vadd.f32 %v130, %v738
  %740 = vmatprep.mubr.bf16.mxu0 %v196
  %741 = vmatmul.mubr.bf16.gmra.mrb[0].mxu0 %v195
  %v742 = vpop.f32.mrb[0].mxu0
  %v743 = vadd.f32 %v126, %v742
  %v744 = vpop.f32.mrb[0].mxu0
  %v745 = vadd.f32 %v130, %v744
  %v746 = vpop.f32.mrb[0].mxu0
  %v747 = vadd.f32 %v126, %v746
  %v748 = vpop.f32.mrb[0].mxu0
  %v749 = vadd.f32 %v130, %v748
  %750 = vmatprep.mubr.bf16.mxu0 %v198
  %751 = vmatmul.mubr.bf16.gmra.mrb[0].mxu0 %v197
  %v752 = vpop.f32.mrb[0].mxu0
  %v753 = vadd.f32 %v126, %v752
  %v754 = vpop.f32.mrb[0].mxu0
  %v755 = vadd.f32 %v130, %v754
  %v756 = vpop.f32.mrb[0].mxu0
  %v757 = vadd.f32 %v126, %v756
  %v758 = vpop.f32.mrb[0].mxu0
  %v759 = vadd.f32 %v130, %v758
  %760 = vdwg.mxu0
  %v761 = vmax.f32 %v570, 0.0
  %v762 = vmax.f32 %v572, 0.0
  %v763 = vmax.f32 %v683, 0.0
  %v764 = vmax.f32 %v685, 0.0
  %v765 = vmax.f32 %v574, 0.0
  %v766 = vmax.f32 %v576, 0.0
  %v767 = vmax.f32 %v687, 0.0
  %v768 = vmax.f32 %v689, 0.0
  %v769 = vmax.f32 %v580, 0.0
  %v770 = vmax.f32 %v582, 0.0
  %v771 = vmax.f32 %v693, 0.0
  %v772 = vmax.f32 %v695, 0.0
  %v773 = vmax.f32 %v584, 0.0
  %v774 = vmax.f32 %v586, 0.0
  %v775 = vmax.f32 %v697, 0.0
  %v776 = vmax.f32 %v699, 0.0
  %v777 = vmax.f32 %v590, 0.0
  %v778 = vmax.f32 %v592, 0.0
  %v779 = vmax.f32 %v703, 0.0
  %v780 = vmax.f32 %v705, 0.0
  %v781 = vmax.f32 %v594, 0.0
  %v782 = vmax.f32 %v596, 0.0
  %v783 = vmax.f32 %v707, 0.0
  %v784 = vmax.f32 %v709, 0.0
  %v785 = vmax.f32 %v600, 0.0
  %v786 = vmax.f32 %v602, 0.0
  %v787 = vmax.f32 %v713, 0.0
  %v788 = vmax.f32 %v715, 0.0
  %v789 = vmax.f32 %v604, 0.0
  %v790 = vmax.f32 %v606, 0.0
  %v791 = vmax.f32 %v717, 0.0
  %v792 = vmax.f32 %v719, 0.0
  %v793 = vmax.f32 %v610, 0.0
  %v794 = vmax.f32 %v612, 0.0
  %v795 = vmax.f32 %v723, 0.0
  %v796 = vmax.f32 %v725, 0.0
  %v797 = vmax.f32 %v614, 0.0
  %v798 = vmax.f32 %v616, 0.0
  %v799 = vmax.f32 %v727, 0.0
  %v800 = vmax.f32 %v729, 0.0
  %v801 = vmax.f32 %v620, 0.0
  %v802 = vmax.f32 %v622, 0.0
  %v803 = vmax.f32 %v733, 0.0
  %v804 = vmax.f32 %v735, 0.0
  %v805 = vmax.f32 %v624, 0.0
  %v806 = vmax.f32 %v626, 0.0
  %v807 = vmax.f32 %v737, 0.0
  %v808 = vmax.f32 %v739, 0.0
  %v809 = vmax.f32 %v630, 0.0
  %v810 = vmax.f32 %v632, 0.0
  %v811 = vmax.f32 %v743, 0.0
  %v812 = vmax.f32 %v745, 0.0
  %v813 = vmax.f32 %v634, 0.0
  %v814 = vmax.f32 %v636, 0.0
  %v815 = vmax.f32 %v747, 0.0
  %v816 = vmax.f32 %v749, 0.0
  %v817 = vmax.f32 %v640, 0.0
  %v818 = vmax.f32 %v642, 0.0
  %v819 = vmax.f32 %v753, 0.0
  %v820 = vmax.f32 %v755, 0.0
  %v821 = vmax.f32 %v644, 0.0
  %v822 = vmax.f32 %v646, 0.0
  %v823 = vmax.f32 %v757, 0.0
  %v824 = vmax.f32 %v759, 0.0
  %v825 = vpack.c.bf16 %v765, %v761
  %v826 = vpack.c.bf16 %v766, %v762
  %v827 = vpack.c.bf16 %v767, %v763
  %v828 = vpack.c.bf16 %v768, %v764
  %v829 = vpack.c.bf16 %v773, %v769
  %v830 = vpack.c.bf16 %v774, %v770
  %v831 = vpack.c.bf16 %v775, %v771
  %v832 = vpack.c.bf16 %v776, %v772
  %v833 = vpack.c.bf16 %v781, %v777
  %v834 = vpack.c.bf16 %v782, %v778
  %v835 = vpack.c.bf16 %v783, %v779
  %v836 = vpack.c.bf16 %v784, %v780
  %v837 = vpack.c.bf16 %v789, %v785
  %v838 = vpack.c.bf16 %v790, %v786
  %v839 = vpack.c.bf16 %v791, %v787
  %v840 = vpack.c.bf16 %v792, %v788
  %v841 = vpack.c.bf16 %v797, %v793
  %v842 = vpack.c.bf16 %v798, %v794
  %v843 = vpack.c.bf16 %v799, %v795
  %v844 = vpack.c.bf16 %v800, %v796
  %v845 = vpack.c.bf16 %v805, %v801
  %v846 = vpack.c.bf16 %v806, %v802
  %v847 = vpack.c.bf16 %v807, %v803
  %v848 = vpack.c.bf16 %v808, %v804
  %v849 = vpack.c.bf16 %v813, %v809
  %v850 = vpack.c.bf16 %v814, %v810
  %v851 = vpack.c.bf16 %v815, %v811
  %v852 = vpack.c.bf16 %v816, %v812
  %v853 = vpack.c.bf16 %v821, %v817
  %v854 = vpack.c.bf16 %v822, %v818
  %v855 = vpack.c.bf16 %v823, %v819
  %v856 = vpack.c.bf16 %v824, %v820
  %v857 = vld [vmem:[%s3] sm:$0xf]
  %v858 = vld [vmem:[%s3 + $0x4] sm:$0xf]
  %v859 = vld [vmem:[%s3 + $0x8] sm:$0xf]
  %v860 = vld [vmem:[%s3 + $0xc] sm:$0xf]
  %v861 = vld [vmem:[%s3 + $0x10] sm:$0xf]
  %v862 = vld [vmem:[%s3 + $0x14] sm:$0xf]
  %v863 = vld [vmem:[%s3 + $0x18] sm:$0xf]
  %v864 = vld [vmem:[%s3 + $0x1c] sm:$0xf]
  %v865 = vld [vmem:[%s3 + $0x20] sm:$0xf]
  %v866 = vld [vmem:[%s3 + $0x24] sm:$0xf]
  %v867 = vld [vmem:[%s3 + $0x28] sm:$0xf]
  %v868 = vld [vmem:[%s3 + $0x2c] sm:$0xf]
  %v869 = vld [vmem:[%s3 + $0x30] sm:$0xf]
  %v870 = vld [vmem:[%s3 + $0x34] sm:$0xf]
  %v871 = vld [vmem:[%s3 + $0x38] sm:$0xf]
  %v872 = vld [vmem:[%s3 + $0x3c] sm:$0xf]
  %v873 = vld [vmem:[%s3 + $0x40] sm:$0xf]
  %v874 = vld [vmem:[%s3 + $0x44] sm:$0xf]
  %v875 = vld [vmem:[%s3 + $0x48] sm:$0xf]
  %v876 = vld [vmem:[%s3 + $0x4c] sm:$0xf]
  %v877 = vld [vmem:[%s3 + $0x50] sm:$0xf]
  %v878 = vld [vmem:[%s3 + $0x54] sm:$0xf]
  %v879 = vld [vmem:[%s3 + $0x58] sm:$0xf]
  %v880 = vld [vmem:[%s3 + $0x5c] sm:$0xf]
  %v881 = vld [vmem:[%s3 + $0x60] sm:$0xf]
  %v882 = vld [vmem:[%s3 + $0x64] sm:$0xf]
  %v883 = vld [vmem:[%s3 + $0x68] sm:$0xf]
  %v884 = vld [vmem:[%s3 + $0x6c] sm:$0xf]
  %v885 = vld [vmem:[%s3 + $0x70] sm:$0xf]
  %v886 = vld [vmem:[%s3 + $0x74] sm:$0xf]
  %v887 = vld [vmem:[%s3 + $0x78] sm:$0xf]
  %v888 = vld [vmem:[%s3 + $0x7c] sm:$0xf]
  %v889 = vld [vmem:[%s3 + $0x80] sm:$0xf]
  %v890 = vld [vmem:[%s3 + $0x84] sm:$0xf]
  %v891 = vld [vmem:[%s3 + $0x88] sm:$0xf]
  %v892 = vld [vmem:[%s3 + $0x8c] sm:$0xf]
  %v893 = vld [vmem:[%s3 + $0x90] sm:$0xf]
  %v894 = vld [vmem:[%s3 + $0x94] sm:$0xf]
  %v895 = vld [vmem:[%s3 + $0x98] sm:$0xf]
  %v896 = vld [vmem:[%s3 + $0x9c] sm:$0xf]
  %v897 = vld [vmem:[%s3 + $0xa0] sm:$0xf]
  %v898 = vld [vmem:[%s3 + $0xa4] sm:$0xf]
  %v899 = vld [vmem:[%s3 + $0xa8] sm:$0xf]
  %v900 = vld [vmem:[%s3 + $0xac] sm:$0xf]
  %v901 = vld [vmem:[%s3 + $0xb0] sm:$0xf]
  %v902 = vld [vmem:[%s3 + $0xb4] sm:$0xf]
  %v903 = vld [vmem:[%s3 + $0xb8] sm:$0xf]
  %v904 = vld [vmem:[%s3 + $0xbc] sm:$0xf]
  %v905 = vld [vmem:[%s3 + $0xc0] sm:$0xf]
  %v906 = vld [vmem:[%s3 + $0xc4] sm:$0xf]
  %v907 = vld [vmem:[%s3 + $0xc8] sm:$0xf]
  %v908 = vld [vmem:[%s3 + $0xcc] sm:$0xf]
  %v909 = vld [vmem:[%s3 + $0xd0] sm:$0xf]
  %v910 = vld [vmem:[%s3 + $0xd4] sm:$0xf]
  %v911 = vld [vmem:[%s3 + $0xd8] sm:$0xf]
  %v912 = vld [vmem:[%s3 + $0xdc] sm:$0xf]
  %v913 = vld [vmem:[%s3 + $0xe0] sm:$0xf]
  %v914 = vld [vmem:[%s3 + $0xe4] sm:$0xf]
  %v915 = vld [vmem:[%s3 + $0xe8] sm:$0xf]
  %v916 = vld [vmem:[%s3 + $0xec] sm:$0xf]
  %v917 = vld [vmem:[%s3 + $0xf0] sm:$0xf]
  %v918 = vld [vmem:[%s3 + $0xf4] sm:$0xf]
  %v919 = vld [vmem:[%s3 + $0xf8] sm:$0xf]
  %v920 = vld [vmem:[%s3 + $0xfc] sm:$0xf]
  %v921 = vld [vmem:[%s4] sm:$0x1]
  %v923 = vlaneseq
  %v924 = vshrl.u32 %v923, 7
  %v925 = vsub.s32 0, %v924
  %v926 = vrot.slane %v921, %v925
  %v992 = vunpack.c.l.b16 %v857
  %v993 = vunpack.c.l.b16 %v858
  %v994 = vunpack.c.l.b16 %v859
  %v995 = vunpack.c.l.b16 %v860
  %v996 = vunpack.c.l.b16 %v861
  %v997 = vunpack.c.l.b16 %v862
  %v998 = vunpack.c.l.b16 %v863
  %v999 = vunpack.c.l.b16 %v864
  %v1000 = vunpack.c.l.b16 %v865
  %v1001 = vunpack.c.l.b16 %v866
  %v1002 = vunpack.c.l.b16 %v867
  %v1003 = vunpack.c.l.b16 %v868
  %v1004 = vunpack.c.l.b16 %v869
  %v1005 = vunpack.c.l.b16 %v870
  %v1006 = vunpack.c.l.b16 %v871
  %v1007 = vunpack.c.l.b16 %v872
  %v1008 = vunpack.c.l.b16 %v873
  %v1009 = vunpack.c.l.b16 %v874
  %v1010 = vunpack.c.l.b16 %v875
  %v1011 = vunpack.c.l.b16 %v876
  %v1012 = vunpack.c.l.b16 %v877
  %v1013 = vunpack.c.l.b16 %v878
  %v1014 = vunpack.c.l.b16 %v879
  %v1015 = vunpack.c.l.b16 %v880
  %v1016 = vunpack.c.l.b16 %v881
  %v1017 = vunpack.c.l.b16 %v882
  %v1018 = vunpack.c.l.b16 %v883
  %v1019 = vunpack.c.l.b16 %v884
  %v1020 = vunpack.c.l.b16 %v885
  %v1021 = vunpack.c.l.b16 %v886
  %v1022 = vunpack.c.l.b16 %v887
  %v1023 = vunpack.c.l.b16 %v888
  %v1024 = vunpack.c.l.b16 %v889
  %v1025 = vunpack.c.l.b16 %v890
  %v1026 = vunpack.c.l.b16 %v891
  %v1027 = vunpack.c.l.b16 %v892
  %v1028 = vunpack.c.l.b16 %v893
  %v1029 = vunpack.c.l.b16 %v894
  %v1030 = vunpack.c.l.b16 %v895
  %v1031 = vunpack.c.l.b16 %v896
  %v1032 = vunpack.c.l.b16 %v897
  %v1033 = vunpack.c.l.b16 %v898
  %v1034 = vunpack.c.l.b16 %v899
  %v1035 = vunpack.c.l.b16 %v900
  %v1036 = vunpack.c.l.b16 %v901
  %v1037 = vunpack.c.l.b16 %v902
  %v1038 = vunpack.c.l.b16 %v903
  %v1039 = vunpack.c.l.b16 %v904
  %v1040 = vunpack.c.l.b16 %v905
  %v1041 = vunpack.c.l.b16 %v906
  %v1042 = vunpack.c.l.b16 %v907
  %v1043 = vunpack.c.l.b16 %v908
  %v1044 = vunpack.c.l.b16 %v909
  %v1045 = vunpack.c.l.b16 %v910
  %v1046 = vunpack.c.l.b16 %v911
  %v1047 = vunpack.c.l.b16 %v912
  %v1048 = vunpack.c.l.b16 %v913
  %v1049 = vunpack.c.l.b16 %v914
  %v1050 = vunpack.c.l.b16 %v915
  %v1051 = vunpack.c.l.b16 %v916
  %v1052 = vunpack.c.l.b16 %v917
  %v1053 = vunpack.c.l.b16 %v918
  %v1054 = vunpack.c.l.b16 %v919
  %v1055 = vunpack.c.l.b16 %v920
  %v1056 = vpack.c.b16 %v993, %v992
  %v1057 = vpack.c.b16 %v995, %v994
  %v1058 = vpack.c.b16 %v997, %v996
  %v1059 = vpack.c.b16 %v999, %v998
  %v1060 = vpack.c.b16 %v1001, %v1000
  %v1061 = vpack.c.b16 %v1003, %v1002
  %v1062 = vpack.c.b16 %v1005, %v1004
  %v1063 = vpack.c.b16 %v1007, %v1006
  %v1064 = vpack.c.b16 %v1009, %v1008
  %v1065 = vpack.c.b16 %v1011, %v1010
  %v1066 = vpack.c.b16 %v1013, %v1012
  %v1067 = vpack.c.b16 %v1015, %v1014
  %v1068 = vpack.c.b16 %v1017, %v1016
  %v1069 = vpack.c.b16 %v1019, %v1018
  %v1070 = vpack.c.b16 %v1021, %v1020
  %v1071 = vpack.c.b16 %v1023, %v1022
  %v1072 = vpack.c.b16 %v1025, %v1024
  %v1073 = vpack.c.b16 %v1027, %v1026
  %v1074 = vpack.c.b16 %v1029, %v1028
  %v1075 = vpack.c.b16 %v1031, %v1030
  %v1076 = vpack.c.b16 %v1033, %v1032
  %v1077 = vpack.c.b16 %v1035, %v1034
  %v1078 = vpack.c.b16 %v1037, %v1036
  %v1079 = vpack.c.b16 %v1039, %v1038
  %v1080 = vpack.c.b16 %v1041, %v1040
  %v1081 = vpack.c.b16 %v1043, %v1042
  %v1082 = vpack.c.b16 %v1045, %v1044
  %v1083 = vpack.c.b16 %v1047, %v1046
  %v1084 = vpack.c.b16 %v1049, %v1048
  %v1085 = vpack.c.b16 %v1051, %v1050
  %v1086 = vpack.c.b16 %v1053, %v1052
  %v1087 = vpack.c.b16 %v1055, %v1054
  %1120 = vmatprep.subr.bf16.mxu0 0
  %1121 = vmatpush1.bf16.msra.mxu0 %v1056
  %1122 = vmatprep.subr.bf16.mxu0 0
  %1123 = vmatpush1.bf16.msra.mxu0 %v1057
  %1124 = vmatprep.subr.bf16.mxu0 0
  %1125 = vmatpush1.bf16.msra.mxu0 %v1058
  %1126 = vmatprep.subr.bf16.mxu0 0
  %1127 = vmatpush1.bf16.msra.mxu0 %v1059
  %1128 = vmatprep.subr.bf16.mxu0 0
  %1129 = vmatpush1.bf16.msra.mxu0 %v1060
  %1130 = vmatprep.subr.bf16.mxu0 0
  %1131 = vmatpush1.bf16.msra.mxu0 %v1061
  %1132 = vmatprep.subr.bf16.mxu0 0
  %1133 = vmatpush1.bf16.msra.mxu0 %v1062
  %1134 = vmatprep.subr.bf16.mxu0 0
  %1135 = vmatpush1.bf16.msra.mxu0 %v1063
  %1136 = vmatprep.subr.bf16.mxu0 0
  %1137 = vmatpush1.bf16.msra.mxu0 %v1064
  %1138 = vmatprep.subr.bf16.mxu0 0
  %1139 = vmatpush1.bf16.msra.mxu0 %v1065
  %1140 = vmatprep.subr.bf16.mxu0 0
  %1141 = vmatpush1.bf16.msra.mxu0 %v1066
  %1142 = vmatprep.subr.bf16.mxu0 0
  %1143 = vmatpush1.bf16.msra.mxu0 %v1067
  %1144 = vmatprep.subr.bf16.mxu0 0
  %1145 = vmatpush1.bf16.msra.mxu0 %v1068
  %1146 = vmatprep.subr.bf16.mxu0 0
  %1147 = vmatpush1.bf16.msra.mxu0 %v1069
  %1148 = vmatprep.subr.bf16.mxu0 0
  %1149 = vmatpush1.bf16.msra.mxu0 %v1070
  %1150 = vmatprep.subr.bf16.mxu0 0
  %1151 = vmatpush1.bf16.msra.mxu0 %v1071
  %1152 = vmatprep.mubr.bf16.mxu0 %v826
  %1153 = vmatmul.mubr.bf16.gmra.mrb[0].mxu0 %v825
  %v1154 = vpop.f32.mrb[0].mxu0
  %v1155 = vadd.f32 %v926, %v1154
  %v1156 = vpop.f32.mrb[0].mxu0
  %v1157 = vpop.f32.mrb[0].mxu0
  %v1158 = vadd.f32 %v926, %v1157
  %v1159 = vpop.f32.mrb[0].mxu0
  %1160 = vmatprep.mubr.bf16.mxu0 %v830
  %1161 = vmatmul.mubr.bf16.gmra.mrb[0].mxu0 %v829
  %v1162 = vpop.f32.mrb[0].mxu0
  %v1163 = vadd.f32 %v926, %v1162
  %v1164 = vpop.f32.mrb[0].mxu0
  %v1165 = vpop.f32.mrb[0].mxu0
  %v1166 = vadd.f32 %v926, %v1165
  %v1167 = vpop.f32.mrb[0].mxu0
  %1168 = vmatprep.mubr.bf16.mxu0 %v834
  %1169 = vmatmul.mubr.bf16.gmra.mrb[0].mxu0 %v833
  %v1170 = vpop.f32.mrb[0].mxu0
  %v1171 = vadd.f32 %v926, %v1170
  %v1172 = vpop.f32.mrb[0].mxu0
  %v1173 = vpop.f32.mrb[0].mxu0
  %v1174 = vadd.f32 %v926, %v1173
  %v1175 = vpop.f32.mrb[0].mxu0
  %1176 = vmatprep.mubr.bf16.mxu0 %v838
  %1177 = vmatmul.mubr.bf16.gmra.mrb[0].mxu0 %v837
  %v1178 = vpop.f32.mrb[0].mxu0
  %v1179 = vadd.f32 %v926, %v1178
  %v1180 = vpop.f32.mrb[0].mxu0
  %v1181 = vpop.f32.mrb[0].mxu0
  %v1182 = vadd.f32 %v926, %v1181
  %v1183 = vpop.f32.mrb[0].mxu0
  %1184 = vmatprep.mubr.bf16.mxu0 %v842
  %1185 = vmatmul.mubr.bf16.gmra.mrb[0].mxu0 %v841
  %v1186 = vpop.f32.mrb[0].mxu0
  %v1187 = vadd.f32 %v926, %v1186
  %v1188 = vpop.f32.mrb[0].mxu0
  %v1189 = vpop.f32.mrb[0].mxu0
  %v1190 = vadd.f32 %v926, %v1189
  %v1191 = vpop.f32.mrb[0].mxu0
  %1192 = vmatprep.mubr.bf16.mxu0 %v846
  %1193 = vmatmul.mubr.bf16.gmra.mrb[0].mxu0 %v845
  %v1194 = vpop.f32.mrb[0].mxu0
  %v1195 = vadd.f32 %v926, %v1194
  %v1196 = vpop.f32.mrb[0].mxu0
  %v1197 = vpop.f32.mrb[0].mxu0
  %v1198 = vadd.f32 %v926, %v1197
  %v1199 = vpop.f32.mrb[0].mxu0
  %1200 = vmatprep.mubr.bf16.mxu0 %v850
  %1201 = vmatmul.mubr.bf16.gmra.mrb[0].mxu0 %v849
  %v1202 = vpop.f32.mrb[0].mxu0
  %v1203 = vadd.f32 %v926, %v1202
  %v1204 = vpop.f32.mrb[0].mxu0
  %v1205 = vpop.f32.mrb[0].mxu0
  %v1206 = vadd.f32 %v926, %v1205
  %v1207 = vpop.f32.mrb[0].mxu0
  %1208 = vmatprep.mubr.bf16.mxu0 %v854
  %1209 = vmatmul.mubr.bf16.gmra.mrb[0].mxu0 %v853
  %v1210 = vpop.f32.mrb[0].mxu0
  %v1211 = vadd.f32 %v926, %v1210
  %v1212 = vpop.f32.mrb[0].mxu0
  %v1213 = vpop.f32.mrb[0].mxu0
  %v1214 = vadd.f32 %v926, %v1213
  %v1215 = vpop.f32.mrb[0].mxu0
  %1216 = vdwg.mxu0
  %1217 = vmatprep.subr.bf16.mxu0 0
  %1218 = vmatpush1.bf16.msra.mxu0 %v1072
  %1219 = vmatprep.subr.bf16.mxu0 0
  %1220 = vmatpush1.bf16.msra.mxu0 %v1073
  %1221 = vmatprep.subr.bf16.mxu0 0
  %1222 = vmatpush1.bf16.msra.mxu0 %v1074
  %1223 = vmatprep.subr.bf16.mxu0 0
  %1224 = vmatpush1.bf16.msra.mxu0 %v1075
  %1225 = vmatprep.subr.bf16.mxu0 0
  %1226 = vmatpush1.bf16.msra.mxu0 %v1076
  %1227 = vmatprep.subr.bf16.mxu0 0
  %1228 = vmatpush1.bf16.msra.mxu0 %v1077
  %1229 = vmatprep.subr.bf16.mxu0 0
  %1230 = vmatpush1.bf16.msra.mxu0 %v1078
  %1231 = vmatprep.subr.bf16.mxu0 0
  %1232 = vmatpush1.bf16.msra.mxu0 %v1079
  %1233 = vmatprep.subr.bf16.mxu0 0
  %1234 = vmatpush1.bf16.msra.mxu0 %v1080
  %1235 = vmatprep.subr.bf16.mxu0 0
  %1236 = vmatpush1.bf16.msra.mxu0 %v1081
  %1237 = vmatprep.subr.bf16.mxu0 0
  %1238 = vmatpush1.bf16.msra.mxu0 %v1082
  %1239 = vmatprep.subr.bf16.mxu0 0
  %1240 = vmatpush1.bf16.msra.mxu0 %v1083
  %1241 = vmatprep.subr.bf16.mxu0 0
  %1242 = vmatpush1.bf16.msra.mxu0 %v1084
  %1243 = vmatprep.subr.bf16.mxu0 0
  %1244 = vmatpush1.bf16.msra.mxu0 %v1085
  %1245 = vmatprep.subr.bf16.mxu0 0
  %1246 = vmatpush1.bf16.msra.mxu0 %v1086
  %1247 = vmatprep.subr.bf16.mxu0 0
  %1248 = vmatpush1.bf16.msra.mxu0 %v1087
  %1249 = vmatprep.mubr.bf16.mxu0 %v828
  %1250 = vmatmul.mubr.bf16.gmra.mrb[0].mxu0 %v827
  %v1251 = vpop.f32.mrb[0].mxu0
  %v1252 = vadd.f32 %v1155, %v1251
  %v1253 = vpop.f32.mrb[0].mxu0
  %v1254 = vpop.f32.mrb[0].mxu0
  %v1255 = vadd.f32 %v1158, %v1254
  %v1256 = vpop.f32.mrb[0].mxu0
  %1257 = vmatprep.mubr.bf16.mxu0 %v832
  %1258 = vmatmul.mubr.bf16.gmra.mrb[0].mxu0 %v831
  %v1259 = vpop.f32.mrb[0].mxu0
  %v1260 = vadd.f32 %v1163, %v1259
  %v1261 = vpop.f32.mrb[0].mxu0
  %v1262 = vpop.f32.mrb[0].mxu0
  %v1263 = vadd.f32 %v1166, %v1262
  %v1264 = vpop.f32.mrb[0].mxu0
  %1265 = vmatprep.mubr.bf16.mxu0 %v836
  %1266 = vmatmul.mubr.bf16.gmra.mrb[0].mxu0 %v835
  %v1267 = vpop.f32.mrb[0].mxu0
  %v1268 = vadd.f32 %v1171, %v1267
  %v1269 = vpop.f32.mrb[0].mxu0
  %v1270 = vpop.f32.mrb[0].mxu0
  %v1271 = vadd.f32 %v1174, %v1270
  %v1272 = vpop.f32.mrb[0].mxu0
  %1273 = vmatprep.mubr.bf16.mxu0 %v840
  %1274 = vmatmul.mubr.bf16.gmra.mrb[0].mxu0 %v839
  %v1275 = vpop.f32.mrb[0].mxu0
  %v1276 = vadd.f32 %v1179, %v1275
  %v1277 = vpop.f32.mrb[0].mxu0
  %v1278 = vpop.f32.mrb[0].mxu0
  %v1279 = vadd.f32 %v1182, %v1278
  %v1280 = vpop.f32.mrb[0].mxu0
  %1281 = vmatprep.mubr.bf16.mxu0 %v844
  %1282 = vmatmul.mubr.bf16.gmra.mrb[0].mxu0 %v843
  %v1283 = vpop.f32.mrb[0].mxu0
  %v1284 = vadd.f32 %v1187, %v1283
  %v1285 = vpop.f32.mrb[0].mxu0
  %v1286 = vpop.f32.mrb[0].mxu0
  %v1287 = vadd.f32 %v1190, %v1286
  %v1288 = vpop.f32.mrb[0].mxu0
  %1289 = vmatprep.mubr.bf16.mxu0 %v848
  %1290 = vmatmul.mubr.bf16.gmra.mrb[0].mxu0 %v847
  %v1291 = vpop.f32.mrb[0].mxu0
  %v1292 = vadd.f32 %v1195, %v1291
  %v1293 = vpop.f32.mrb[0].mxu0
  %v1294 = vpop.f32.mrb[0].mxu0
  %v1295 = vadd.f32 %v1198, %v1294
  %v1296 = vpop.f32.mrb[0].mxu0
  %1297 = vmatprep.mubr.bf16.mxu0 %v852
  %1298 = vmatmul.mubr.bf16.gmra.mrb[0].mxu0 %v851
  %v1299 = vpop.f32.mrb[0].mxu0
  %v1300 = vadd.f32 %v1203, %v1299
  %v1301 = vpop.f32.mrb[0].mxu0
  %v1302 = vpop.f32.mrb[0].mxu0
  %v1303 = vadd.f32 %v1206, %v1302
  %v1304 = vpop.f32.mrb[0].mxu0
  %1305 = vmatprep.mubr.bf16.mxu0 %v856
  %1306 = vmatmul.mubr.bf16.gmra.mrb[0].mxu0 %v855
  %v1307 = vpop.f32.mrb[0].mxu0
  %v1308 = vadd.f32 %v1211, %v1307
  %v1309 = vpop.f32.mrb[0].mxu0
  %v1310 = vpop.f32.mrb[0].mxu0
  %v1311 = vadd.f32 %v1214, %v1310
  %v1312 = vpop.f32.mrb[0].mxu0
  %1313 = vdwg.mxu0
  %v1314 = vmax.f32 %v1252, 0.0
  %v1315 = vmax.f32 %v1255, 0.0
  %v1316 = vmax.f32 %v1260, 0.0
  %v1317 = vmax.f32 %v1263, 0.0
  %v1318 = vmax.f32 %v1268, 0.0
  %v1319 = vmax.f32 %v1271, 0.0
  %v1320 = vmax.f32 %v1276, 0.0
  %v1321 = vmax.f32 %v1279, 0.0
  %v1322 = vmax.f32 %v1284, 0.0
  %v1323 = vmax.f32 %v1287, 0.0
  %v1324 = vmax.f32 %v1292, 0.0
  %v1325 = vmax.f32 %v1295, 0.0
  %v1326 = vmax.f32 %v1300, 0.0
  %v1327 = vmax.f32 %v1303, 0.0
  %v1328 = vmax.f32 %v1308, 0.0
  %v1329 = vmax.f32 %v1311, 0.0
  %v1330 = vpack.c.bf16 %v1315, %v1314
  %v1331 = vpack.c.bf16 %v1317, %v1316
  %v1332 = vpack.c.bf16 %v1319, %v1318
  %v1333 = vpack.c.bf16 %v1321, %v1320
  %v1334 = vpack.c.bf16 %v1323, %v1322
  %v1335 = vpack.c.bf16 %v1325, %v1324
  %v1336 = vpack.c.bf16 %v1327, %v1326
  %v1337 = vpack.c.bf16 %v1329, %v1328
  %v1338 = vld [vmem:[%s5] sm:$0xf]
  %v1339 = vld [vmem:[%s5 + $0x4] sm:$0xf]
  %v1340 = vld [vmem:[%s5 + $0x8] sm:$0xf]
  %v1341 = vld [vmem:[%s5 + $0xc] sm:$0xf]
  %v1342 = vld [vmem:[%s5 + $0x10] sm:$0xf]
  %v1343 = vld [vmem:[%s5 + $0x14] sm:$0xf]
  %v1344 = vld [vmem:[%s5 + $0x18] sm:$0xf]
  %v1345 = vld [vmem:[%s5 + $0x1c] sm:$0xf]
  %s1346 = scalar_lea.vmem %s5, 32
  %v1347 = vld [vmem:[%s1346] sm:$0xf]
  %v1348 = vld [vmem:[%s1346 + $0x4] sm:$0xf]
  %v1349 = vld [vmem:[%s1346 + $0x8] sm:$0xf]
  %v1350 = vld [vmem:[%s1346 + $0xc] sm:$0xf]
  %v1351 = vld [vmem:[%s1346 + $0x10] sm:$0xf]
  %v1352 = vld [vmem:[%s1346 + $0x14] sm:$0xf]
  %v1353 = vld [vmem:[%s1346 + $0x18] sm:$0xf]
  %v1354 = vld [vmem:[%s1346 + $0x1c] sm:$0xf]
  %v1363 = vunpack.c.l.b16 %v1330
  %v1364 = vunpack.c.l.b16 %v1331
  %v1365 = vunpack.c.l.b16 %v1332
  %v1366 = vunpack.c.l.b16 %v1333
  %v1367 = vunpack.c.l.b16 %v1334
  %v1368 = vunpack.c.l.b16 %v1335
  %v1369 = vunpack.c.l.b16 %v1336
  %v1370 = vunpack.c.l.b16 %v1337
  %v1371 = vrot.slane %v1363, 1
  %vm1372 = vcmask 1041409
  %v1373 = vsel %vm1372, %v1364, %v1371
  %v1374 = vrot.slane %v1365, 7
  %vm1375 = vcmask 1042434
  %v1376 = vsel %vm1375, %v1374, %v1373
  %v1377 = vrot.slane %v1366, 6
  %vm1378 = vcmask 1043459
  %v1379 = vsel %vm1378, %v1377, %v1376
  %v1380 = vrot.slane %v1367, 5
  %vm1381 = vcmask 1044484
  %v1382 = vsel %vm1381, %v1380, %v1379
  %v1383 = vrot.slane %v1368, 4
  %vm1384 = vcmask 1045509
  %v1385 = vsel %vm1384, %v1383, %v1382
  %v1386 = vrot.slane %v1369, 3
  %vm1387 = vcmask 1046534
  %v1388 = vsel %vm1387, %v1386, %v1385
  %v1389 = vrot.slane %v1370, 2
  %vm1390 = vcmask 1047559
  %v1391 = vsel %vm1390, %v1389, %v1388
  %v1392 = vpack.c.b16 %v1391, %v1391
  %v1401 = vunpack.c.l.b16 %v1347
  %v1402 = vunpack.c.l.b16 %v1348
  %v1403 = vunpack.c.l.b16 %v1349
  %v1404 = vunpack.c.l.b16 %v1350
  %v1405 = vunpack.c.l.b16 %v1351
  %v1406 = vunpack.c.l.b16 %v1352
  %v1407 = vunpack.c.l.b16 %v1353
  %v1408 = vunpack.c.l.b16 %v1354
  %v1409 = vpack.c.b16 %v1402, %v1401
  %v1410 = vpack.c.b16 %v1404, %v1403
  %v1411 = vpack.c.b16 %v1406, %v1405
  %v1412 = vpack.c.b16 %v1408, %v1407
  %vm1417 = vcmask 523264
  %v1419 = vsel %vm1417, %v1392, 0
  %1421 = vmatprep.subr.bf16.mxu0 0
  %1422 = vmatpush1.bf16.msra.mxu0 %v1409
  %1423 = vmatprep.subr.bf16.mxu0 0
  %1424 = vmatpush1.bf16.msra.mxu0 %v1410
  %1425 = vmatprep.subr.bf16.mxu0 0
  %1426 = vmatpush1.bf16.msra.mxu0 %v1411
  %1427 = vmatprep.subr.bf16.mxu0 0
  %1428 = vmatpush1.bf16.msra.mxu0 %v1412
  %1429 = vmatprep.subr.bf16.mxu0 0
  %1430 = vmatpush1.bf16.msra.mxu0 0
  %1431 = vmatprep.subr.bf16.mxu0 0
  %1432 = vmatpush1.bf16.msra.mxu0 0
  %1433 = vmatprep.subr.bf16.mxu0 0
  %1434 = vmatpush1.bf16.msra.mxu0 0
  %1435 = vmatprep.subr.bf16.mxu0 0
  %1436 = vmatpush1.bf16.msra.mxu0 0
  %1437 = vmatprep.subr.bf16.mxu0 0
  %1438 = vmatpush1.bf16.msra.mxu0 0
  %1439 = vmatprep.subr.bf16.mxu0 0
  %1440 = vmatpush1.bf16.msra.mxu0 0
  %1441 = vmatprep.subr.bf16.mxu0 0
  %1442 = vmatpush1.bf16.msra.mxu0 0
  %1443 = vmatprep.subr.bf16.mxu0 0
  %1444 = vmatpush1.bf16.msra.mxu0 0
  %1445 = vmatprep.subr.bf16.mxu0 0
  %1446 = vmatpush1.bf16.msra.mxu0 0
  %1447 = vmatprep.subr.bf16.mxu0 0
  %1448 = vmatpush1.bf16.msra.mxu0 0
  %1449 = vmatprep.subr.bf16.mxu0 0
  %1450 = vmatpush1.bf16.msra.mxu0 0
  %1451 = vmatprep.subr.bf16.mxu0 0
  %1452 = vmatpush1.bf16.msra.mxu0 0
  %1453 = vmatprep.mubr.bf16.mxu0 0
  %1454 = vmatmul.mubr.bf16.gmra.mrb[0].mxu0 %v1419
  %v1455 = vpop.f32.mrb[0].mxu0
  %v1456 = vadd.f32 0.0, %v1455
  %v1457 = vpop.f32.mrb[0].mxu0
  %v1458 = vpop.f32.mrb[0].mxu0
  %v1459 = vpop.f32.mrb[0].mxu0
  %1460 = vdwg.mxu0
  %v1461 = vrot.slane %v1364, 7
  %v1462 = vsel %vm1372, %v1461, %v1363
  %v1463 = vrot.slane %v1365, 6
  %v1464 = vsel %vm1375, %v1463, %v1462
  %v1465 = vrot.slane %v1366, 5
  %v1466 = vsel %vm1378, %v1465, %v1464
  %v1467 = vrot.slane %v1367, 4
  %v1468 = vsel %vm1381, %v1467, %v1466
  %v1469 = vrot.slane %v1368, 3
  %v1470 = vsel %vm1384, %v1469, %v1468
  %v1471 = vrot.slane %v1369, 2
  %v1472 = vsel %vm1387, %v1471, %v1470
  %v1473 = vrot.slane %v1370, 1
  %v1474 = vsel %vm1390, %v1473, %v1472
  %v1475 = vpack.c.b16 %v1474, %v1474
  %v1484 = vunpack.c.l.b16 %v1338
  %v1485 = vunpack.c.l.b16 %v1339
  %v1486 = vunpack.c.l.b16 %v1340
  %v1487 = vunpack.c.l.b16 %v1341
  %v1488 = vunpack.c.l.b16 %v1342
  %v1489 = vunpack.c.l.b16 %v1343
  %v1490 = vunpack.c.l.b16 %v1344
  %v1491 = vunpack.c.l.b16 %v1345
  %v1492 = vpack.c.b16 %v1485, %v1484
  %v1493 = vpack.c.b16 %v1487, %v1486
  %v1494 = vpack.c.b16 %v1489, %v1488
  %v1495 = vpack.c.b16 %v1491, %v1490
  %v1501 = vsel %vm1417, %v1475, 0
  %1503 = vmatprep.subr.bf16.mxu0 0
  %1504 = vmatpush1.bf16.msra.mxu0 %v1492
  %1505 = vmatprep.subr.bf16.mxu0 0
  %1506 = vmatpush1.bf16.msra.mxu0 %v1493
  %1507 = vmatprep.subr.bf16.mxu0 0
  %1508 = vmatpush1.bf16.msra.mxu0 %v1494
  %1509 = vmatprep.subr.bf16.mxu0 0
  %1510 = vmatpush1.bf16.msra.mxu0 %v1495
  %1511 = vmatprep.subr.bf16.mxu0 0
  %1512 = vmatpush1.bf16.msra.mxu0 0
  %1513 = vmatprep.subr.bf16.mxu0 0
  %1514 = vmatpush1.bf16.msra.mxu0 0
  %1515 = vmatprep.subr.bf16.mxu0 0
  %1516 = vmatpush1.bf16.msra.mxu0 0
  %1517 = vmatprep.subr.bf16.mxu0 0
  %1518 = vmatpush1.bf16.msra.mxu0 0
  %1519 = vmatprep.subr.bf16.mxu0 0
  %1520 = vmatpush1.bf16.msra.mxu0 0
  %1521 = vmatprep.subr.bf16.mxu0 0
  %1522 = vmatpush1.bf16.msra.mxu0 0
  %1523 = vmatprep.subr.bf16.mxu0 0
  %1524 = vmatpush1.bf16.msra.mxu0 0
  %1525 = vmatprep.subr.bf16.mxu0 0
  %1526 = vmatpush1.bf16.msra.mxu0 0
  %1527 = vmatprep.subr.bf16.mxu0 0
  %1528 = vmatpush1.bf16.msra.mxu0 0
  %1529 = vmatprep.subr.bf16.mxu0 0
  %1530 = vmatpush1.bf16.msra.mxu0 0
  %1531 = vmatprep.subr.bf16.mxu0 0
  %1532 = vmatpush1.bf16.msra.mxu0 0
  %1533 = vmatprep.subr.bf16.mxu0 0
  %1534 = vmatpush1.bf16.msra.mxu0 0
  %1535 = vmatprep.mubr.bf16.mxu0 0
  %1536 = vmatmul.mubr.bf16.gmra.mrb[0].mxu0 %v1501
  %v1537 = vpop.f32.mrb[0].mxu0
  %v1538 = vadd.f32 %v1456, %v1537
  %v1539 = vpop.f32.mrb[0].mxu0
  %v1540 = vpop.f32.mrb[0].mxu0
  %v1541 = vpop.f32.mrb[0].mxu0
  %1542 = vdwg.mxu0
  %s1543 = scalar_lea.vmem %s5, 64
  %v1544 = vld [vmem:[%s1543] sm:$0xf]
  %v1545 = vld [vmem:[%s1543 + $0x4] sm:$0xf]
  %v1546 = vld [vmem:[%s1543 + $0x8] sm:$0xf]
  %v1547 = vld [vmem:[%s1543 + $0xc] sm:$0xf]
  %v1548 = vld [vmem:[%s1543 + $0x10] sm:$0xf]
  %v1549 = vld [vmem:[%s1543 + $0x14] sm:$0xf]
  %v1550 = vld [vmem:[%s1543 + $0x18] sm:$0xf]
  %v1551 = vld [vmem:[%s1543 + $0x1c] sm:$0xf]
  %v1552 = vrot.slane %v1363, 2
  %v1553 = vrot.slane %v1364, 1
  %v1554 = vsel %vm1372, %v1553, %v1552
  %v1555 = vsel %vm1375, %v1365, %v1554
  %v1556 = vrot.slane %v1366, 7
  %v1557 = vsel %vm1378, %v1556, %v1555
  %v1558 = vrot.slane %v1367, 6
  %v1559 = vsel %vm1381, %v1558, %v1557
  %v1560 = vrot.slane %v1368, 5
  %v1561 = vsel %vm1384, %v1560, %v1559
  %v1562 = vrot.slane %v1369, 4
  %v1563 = vsel %vm1387, %v1562, %v1561
  %v1564 = vrot.slane %v1370, 3
  %v1565 = vsel %vm1390, %v1564, %v1563
  %v1566 = vpack.c.b16 %v1565, %v1565
  %v1575 = vunpack.c.l.b16 %v1544
  %v1576 = vunpack.c.l.b16 %v1545
  %v1577 = vunpack.c.l.b16 %v1546
  %v1578 = vunpack.c.l.b16 %v1547
  %v1579 = vunpack.c.l.b16 %v1548
  %v1580 = vunpack.c.l.b16 %v1549
  %v1581 = vunpack.c.l.b16 %v1550
  %v1582 = vunpack.c.l.b16 %v1551
  %v1583 = vpack.c.b16 %v1576, %v1575
  %v1584 = vpack.c.b16 %v1578, %v1577
  %v1585 = vpack.c.b16 %v1580, %v1579
  %v1586 = vpack.c.b16 %v1582, %v1581
  %v1592 = vsel %vm1417, %v1566, 0
  %1594 = vmatprep.subr.bf16.mxu0 0
  %1595 = vmatpush1.bf16.msra.mxu0 %v1583
  %1596 = vmatprep.subr.bf16.mxu0 0
  %1597 = vmatpush1.bf16.msra.mxu0 %v1584
  %1598 = vmatprep.subr.bf16.mxu0 0
  %1599 = vmatpush1.bf16.msra.mxu0 %v1585
  %1600 = vmatprep.subr.bf16.mxu0 0
  %1601 = vmatpush1.bf16.msra.mxu0 %v1586
  %1602 = vmatprep.subr.bf16.mxu0 0
  %1603 = vmatpush1.bf16.msra.mxu0 0
  %1604 = vmatprep.subr.bf16.mxu0 0
  %1605 = vmatpush1.bf16.msra.mxu0 0
  %1606 = vmatprep.subr.bf16.mxu0 0
  %1607 = vmatpush1.bf16.msra.mxu0 0
  %1608 = vmatprep.subr.bf16.mxu0 0
  %1609 = vmatpush1.bf16.msra.mxu0 0
  %1610 = vmatprep.subr.bf16.mxu0 0
  %1611 = vmatpush1.bf16.msra.mxu0 0
  %1612 = vmatprep.subr.bf16.mxu0 0
  %1613 = vmatpush1.bf16.msra.mxu0 0
  %1614 = vmatprep.subr.bf16.mxu0 0
  %1615 = vmatpush1.bf16.msra.mxu0 0
  %1616 = vmatprep.subr.bf16.mxu0 0
  %1617 = vmatpush1.bf16.msra.mxu0 0
  %1618 = vmatprep.subr.bf16.mxu0 0
  %1619 = vmatpush1.bf16.msra.mxu0 0
  %1620 = vmatprep.subr.bf16.mxu0 0
  %1621 = vmatpush1.bf16.msra.mxu0 0
  %1622 = vmatprep.subr.bf16.mxu0 0
  %1623 = vmatpush1.bf16.msra.mxu0 0
  %1624 = vmatprep.subr.bf16.mxu0 0
  %1625 = vmatpush1.bf16.msra.mxu0 0
  %1626 = vmatprep.mubr.bf16.mxu0 0
  %1627 = vmatmul.mubr.bf16.gmra.mrb[0].mxu0 %v1592
  %v1628 = vpop.f32.mrb[0].mxu0
  %v1629 = vadd.f32 0.0, %v1628
  %v1630 = vpop.f32.mrb[0].mxu0
  %v1631 = vpop.f32.mrb[0].mxu0
  %v1632 = vpop.f32.mrb[0].mxu0
  %1633 = vdwg.mxu0
  %v1634 = vadd.f32 %v1538, %v1629
  %s1635 = scalar_lea.vmem %s5, 96
  %v1636 = vld [vmem:[%s1635] sm:$0xf]
  %v1637 = vld [vmem:[%s1635 + $0x4] sm:$0xf]
  %v1638 = vld [vmem:[%s1635 + $0x8] sm:$0xf]
  %v1639 = vld [vmem:[%s1635 + $0xc] sm:$0xf]
  %v1640 = vld [vmem:[%s1635 + $0x10] sm:$0xf]
  %v1641 = vld [vmem:[%s1635 + $0x14] sm:$0xf]
  %v1642 = vld [vmem:[%s1635 + $0x18] sm:$0xf]
  %v1643 = vld [vmem:[%s1635 + $0x1c] sm:$0xf]
  %v1644 = vrot.slane %v1363, 3
  %v1645 = vrot.slane %v1364, 2
  %v1646 = vsel %vm1372, %v1645, %v1644
  %v1647 = vrot.slane %v1365, 1
  %v1648 = vsel %vm1375, %v1647, %v1646
  %v1649 = vsel %vm1378, %v1366, %v1648
  %v1650 = vrot.slane %v1367, 7
  %v1651 = vsel %vm1381, %v1650, %v1649
  %v1652 = vrot.slane %v1368, 6
  %v1653 = vsel %vm1384, %v1652, %v1651
  %v1654 = vrot.slane %v1369, 5
  %v1655 = vsel %vm1387, %v1654, %v1653
  %v1656 = vrot.slane %v1370, 4
  %v1657 = vsel %vm1390, %v1656, %v1655
  %v1658 = vpack.c.b16 %v1657, %v1657
  %v1667 = vunpack.c.l.b16 %v1636
  %v1668 = vunpack.c.l.b16 %v1637
  %v1669 = vunpack.c.l.b16 %v1638
  %v1670 = vunpack.c.l.b16 %v1639
  %v1671 = vunpack.c.l.b16 %v1640
  %v1672 = vunpack.c.l.b16 %v1641
  %v1673 = vunpack.c.l.b16 %v1642
  %v1674 = vunpack.c.l.b16 %v1643
  %v1675 = vpack.c.b16 %v1668, %v1667
  %v1676 = vpack.c.b16 %v1670, %v1669
  %v1677 = vpack.c.b16 %v1672, %v1671
  %v1678 = vpack.c.b16 %v1674, %v1673
  %v1684 = vsel %vm1417, %v1658, 0
  %1686 = vmatprep.subr.bf16.mxu0 0
  %1687 = vmatpush1.bf16.msra.mxu0 %v1675
  %1688 = vmatprep.subr.bf16.mxu0 0
  %1689 = vmatpush1.bf16.msra.mxu0 %v1676
  %1690 = vmatprep.subr.bf16.mxu0 0
  %1691 = vmatpush1.bf16.msra.mxu0 %v1677
  %1692 = vmatprep.subr.bf16.mxu0 0
  %1693 = vmatpush1.bf16.msra.mxu0 %v1678
  %1694 = vmatprep.subr.bf16.mxu0 0
  %1695 = vmatpush1.bf16.msra.mxu0 0
  %1696 = vmatprep.subr.bf16.mxu0 0
  %1697 = vmatpush1.bf16.msra.mxu0 0
  %1698 = vmatprep.subr.bf16.mxu0 0
  %1699 = vmatpush1.bf16.msra.mxu0 0
  %1700 = vmatprep.subr.bf16.mxu0 0
  %1701 = vmatpush1.bf16.msra.mxu0 0
  %1702 = vmatprep.subr.bf16.mxu0 0
  %1703 = vmatpush1.bf16.msra.mxu0 0
  %1704 = vmatprep.subr.bf16.mxu0 0
  %1705 = vmatpush1.bf16.msra.mxu0 0
  %1706 = vmatprep.subr.bf16.mxu0 0
  %1707 = vmatpush1.bf16.msra.mxu0 0
  %1708 = vmatprep.subr.bf16.mxu0 0
  %1709 = vmatpush1.bf16.msra.mxu0 0
  %1710 = vmatprep.subr.bf16.mxu0 0
  %1711 = vmatpush1.bf16.msra.mxu0 0
  %1712 = vmatprep.subr.bf16.mxu0 0
  %1713 = vmatpush1.bf16.msra.mxu0 0
  %1714 = vmatprep.subr.bf16.mxu0 0
  %1715 = vmatpush1.bf16.msra.mxu0 0
  %1716 = vmatprep.subr.bf16.mxu0 0
  %1717 = vmatpush1.bf16.msra.mxu0 0
  %1718 = vmatprep.mubr.bf16.mxu0 0
  %1719 = vmatmul.mubr.bf16.gmra.mrb[0].mxu0 %v1684
  %v1720 = vpop.f32.mrb[0].mxu0
  %v1721 = vadd.f32 0.0, %v1720
  %v1722 = vpop.f32.mrb[0].mxu0
  %v1723 = vpop.f32.mrb[0].mxu0
  %v1724 = vpop.f32.mrb[0].mxu0
  %1725 = vdwg.mxu0
  %v1726 = vadd.f32 %v1634, %v1721
  %s1727 = scalar_lea.vmem %s5, 128
  %v1728 = vld [vmem:[%s1727] sm:$0xf]
  %v1729 = vld [vmem:[%s1727 + $0x4] sm:$0xf]
  %v1730 = vld [vmem:[%s1727 + $0x8] sm:$0xf]
  %v1731 = vld [vmem:[%s1727 + $0xc] sm:$0xf]
  %v1732 = vld [vmem:[%s1727 + $0x10] sm:$0xf]
  %v1733 = vld [vmem:[%s1727 + $0x14] sm:$0xf]
  %v1734 = vld [vmem:[%s1727 + $0x18] sm:$0xf]
  %v1735 = vld [vmem:[%s1727 + $0x1c] sm:$0xf]
  %v1736 = vrot.slane %v1363, 4
  %v1737 = vrot.slane %v1364, 3
  %v1738 = vsel %vm1372, %v1737, %v1736
  %v1739 = vrot.slane %v1365, 2
  %v1740 = vsel %vm1375, %v1739, %v1738
  %v1741 = vrot.slane %v1366, 1
  %v1742 = vsel %vm1378, %v1741, %v1740
  %v1743 = vsel %vm1381, %v1367, %v1742
  %v1744 = vrot.slane %v1368, 7
  %v1745 = vsel %vm1384, %v1744, %v1743
  %v1746 = vrot.slane %v1369, 6
  %v1747 = vsel %vm1387, %v1746, %v1745
  %v1748 = vrot.slane %v1370, 5
  %v1749 = vsel %vm1390, %v1748, %v1747
  %v1750 = vpack.c.b16 %v1749, %v1749
  %v1759 = vunpack.c.l.b16 %v1728
  %v1760 = vunpack.c.l.b16 %v1729
  %v1761 = vunpack.c.l.b16 %v1730
  %v1762 = vunpack.c.l.b16 %v1731
  %v1763 = vunpack.c.l.b16 %v1732
  %v1764 = vunpack.c.l.b16 %v1733
  %v1765 = vunpack.c.l.b16 %v1734
  %v1766 = vunpack.c.l.b16 %v1735
  %v1767 = vpack.c.b16 %v1760, %v1759
  %v1768 = vpack.c.b16 %v1762, %v1761
  %v1769 = vpack.c.b16 %v1764, %v1763
  %v1770 = vpack.c.b16 %v1766, %v1765
  %v1776 = vsel %vm1417, %v1750, 0
  %1778 = vmatprep.subr.bf16.mxu0 0
  %1779 = vmatpush1.bf16.msra.mxu0 %v1767
  %1780 = vmatprep.subr.bf16.mxu0 0
  %1781 = vmatpush1.bf16.msra.mxu0 %v1768
  %1782 = vmatprep.subr.bf16.mxu0 0
  %1783 = vmatpush1.bf16.msra.mxu0 %v1769
  %1784 = vmatprep.subr.bf16.mxu0 0
  %1785 = vmatpush1.bf16.msra.mxu0 %v1770
  %1786 = vmatprep.subr.bf16.mxu0 0
  %1787 = vmatpush1.bf16.msra.mxu0 0
  %1788 = vmatprep.subr.bf16.mxu0 0
  %1789 = vmatpush1.bf16.msra.mxu0 0
  %1790 = vmatprep.subr.bf16.mxu0 0
  %1791 = vmatpush1.bf16.msra.mxu0 0
  %1792 = vmatprep.subr.bf16.mxu0 0
  %1793 = vmatpush1.bf16.msra.mxu0 0
  %1794 = vmatprep.subr.bf16.mxu0 0
  %1795 = vmatpush1.bf16.msra.mxu0 0
  %1796 = vmatprep.subr.bf16.mxu0 0
  %1797 = vmatpush1.bf16.msra.mxu0 0
  %1798 = vmatprep.subr.bf16.mxu0 0
  %1799 = vmatpush1.bf16.msra.mxu0 0
  %1800 = vmatprep.subr.bf16.mxu0 0
  %1801 = vmatpush1.bf16.msra.mxu0 0
  %1802 = vmatprep.subr.bf16.mxu0 0
  %1803 = vmatpush1.bf16.msra.mxu0 0
  %1804 = vmatprep.subr.bf16.mxu0 0
  %1805 = vmatpush1.bf16.msra.mxu0 0
  %1806 = vmatprep.subr.bf16.mxu0 0
  %1807 = vmatpush1.bf16.msra.mxu0 0
  %1808 = vmatprep.subr.bf16.mxu0 0
  %1809 = vmatpush1.bf16.msra.mxu0 0
  %1810 = vmatprep.mubr.bf16.mxu0 0
  %1811 = vmatmul.mubr.bf16.gmra.mrb[0].mxu0 %v1776
  %v1812 = vpop.f32.mrb[0].mxu0
  %v1813 = vadd.f32 0.0, %v1812
  %v1814 = vpop.f32.mrb[0].mxu0
  %v1815 = vpop.f32.mrb[0].mxu0
  %v1816 = vpop.f32.mrb[0].mxu0
  %1817 = vdwg.mxu0
  %v1818 = vadd.f32 %v1726, %v1813
  %s1819 = scalar_lea.vmem %s5, 160
  %v1820 = vld [vmem:[%s1819] sm:$0xf]
  %v1821 = vld [vmem:[%s1819 + $0x4] sm:$0xf]
  %v1822 = vld [vmem:[%s1819 + $0x8] sm:$0xf]
  %v1823 = vld [vmem:[%s1819 + $0xc] sm:$0xf]
  %v1824 = vld [vmem:[%s1819 + $0x10] sm:$0xf]
  %v1825 = vld [vmem:[%s1819 + $0x14] sm:$0xf]
  %v1826 = vld [vmem:[%s1819 + $0x18] sm:$0xf]
  %v1827 = vld [vmem:[%s1819 + $0x1c] sm:$0xf]
  %v1828 = vrot.slane %v1363, 5
  %v1829 = vrot.slane %v1364, 4
  %v1830 = vsel %vm1372, %v1829, %v1828
  %v1831 = vrot.slane %v1365, 3
  %v1832 = vsel %vm1375, %v1831, %v1830
  %v1833 = vrot.slane %v1366, 2
  %v1834 = vsel %vm1378, %v1833, %v1832
  %v1835 = vrot.slane %v1367, 1
  %v1836 = vsel %vm1381, %v1835, %v1834
  %v1837 = vsel %vm1384, %v1368, %v1836
  %v1838 = vrot.slane %v1369, 7
  %v1839 = vsel %vm1387, %v1838, %v1837
  %v1840 = vrot.slane %v1370, 6
  %v1841 = vsel %vm1390, %v1840, %v1839
  %v1842 = vpack.c.b16 %v1841, %v1841
  %v1851 = vunpack.c.l.b16 %v1820
  %v1852 = vunpack.c.l.b16 %v1821
  %v1853 = vunpack.c.l.b16 %v1822
  %v1854 = vunpack.c.l.b16 %v1823
  %v1855 = vunpack.c.l.b16 %v1824
  %v1856 = vunpack.c.l.b16 %v1825
  %v1857 = vunpack.c.l.b16 %v1826
  %v1858 = vunpack.c.l.b16 %v1827
  %v1859 = vpack.c.b16 %v1852, %v1851
  %v1860 = vpack.c.b16 %v1854, %v1853
  %v1861 = vpack.c.b16 %v1856, %v1855
  %v1862 = vpack.c.b16 %v1858, %v1857
  %v1868 = vsel %vm1417, %v1842, 0
  %1870 = vmatprep.subr.bf16.mxu0 0
  %1871 = vmatpush1.bf16.msra.mxu0 %v1859
  %1872 = vmatprep.subr.bf16.mxu0 0
  %1873 = vmatpush1.bf16.msra.mxu0 %v1860
  %1874 = vmatprep.subr.bf16.mxu0 0
  %1875 = vmatpush1.bf16.msra.mxu0 %v1861
  %1876 = vmatprep.subr.bf16.mxu0 0
  %1877 = vmatpush1.bf16.msra.mxu0 %v1862
  %1878 = vmatprep.subr.bf16.mxu0 0
  %1879 = vmatpush1.bf16.msra.mxu0 0
  %1880 = vmatprep.subr.bf16.mxu0 0
  %1881 = vmatpush1.bf16.msra.mxu0 0
  %1882 = vmatprep.subr.bf16.mxu0 0
  %1883 = vmatpush1.bf16.msra.mxu0 0
  %1884 = vmatprep.subr.bf16.mxu0 0
  %1885 = vmatpush1.bf16.msra.mxu0 0
  %1886 = vmatprep.subr.bf16.mxu0 0
  %1887 = vmatpush1.bf16.msra.mxu0 0
  %1888 = vmatprep.subr.bf16.mxu0 0
  %1889 = vmatpush1.bf16.msra.mxu0 0
  %1890 = vmatprep.subr.bf16.mxu0 0
  %1891 = vmatpush1.bf16.msra.mxu0 0
  %1892 = vmatprep.subr.bf16.mxu0 0
  %1893 = vmatpush1.bf16.msra.mxu0 0
  %1894 = vmatprep.subr.bf16.mxu0 0
  %1895 = vmatpush1.bf16.msra.mxu0 0
  %1896 = vmatprep.subr.bf16.mxu0 0
  %1897 = vmatpush1.bf16.msra.mxu0 0
  %1898 = vmatprep.subr.bf16.mxu0 0
  %1899 = vmatpush1.bf16.msra.mxu0 0
  %1900 = vmatprep.subr.bf16.mxu0 0
  %1901 = vmatpush1.bf16.msra.mxu0 0
  %1902 = vmatprep.mubr.bf16.mxu0 0
  %1903 = vmatmul.mubr.bf16.gmra.mrb[0].mxu0 %v1868
  %v1904 = vpop.f32.mrb[0].mxu0
  %v1905 = vadd.f32 0.0, %v1904
  %v1906 = vpop.f32.mrb[0].mxu0
  %v1907 = vpop.f32.mrb[0].mxu0
  %v1908 = vpop.f32.mrb[0].mxu0
  %1909 = vdwg.mxu0
  %v1910 = vadd.f32 %v1818, %v1905
  %s1911 = scalar_lea.vmem %s5, 192
  %v1912 = vld [vmem:[%s1911] sm:$0xf]
  %v1913 = vld [vmem:[%s1911 + $0x4] sm:$0xf]
  %v1914 = vld [vmem:[%s1911 + $0x8] sm:$0xf]
  %v1915 = vld [vmem:[%s1911 + $0xc] sm:$0xf]
  %v1916 = vld [vmem:[%s1911 + $0x10] sm:$0xf]
  %v1917 = vld [vmem:[%s1911 + $0x14] sm:$0xf]
  %v1918 = vld [vmem:[%s1911 + $0x18] sm:$0xf]
  %v1919 = vld [vmem:[%s1911 + $0x1c] sm:$0xf]
  %v1920 = vrot.slane %v1363, 6
  %v1921 = vrot.slane %v1364, 5
  %v1922 = vsel %vm1372, %v1921, %v1920
  %v1923 = vrot.slane %v1365, 4
  %v1924 = vsel %vm1375, %v1923, %v1922
  %v1925 = vrot.slane %v1366, 3
  %v1926 = vsel %vm1378, %v1925, %v1924
  %v1927 = vrot.slane %v1367, 2
  %v1928 = vsel %vm1381, %v1927, %v1926
  %v1929 = vrot.slane %v1368, 1
  %v1930 = vsel %vm1384, %v1929, %v1928
  %v1931 = vsel %vm1387, %v1369, %v1930
  %v1932 = vrot.slane %v1370, 7
  %v1933 = vsel %vm1390, %v1932, %v1931
  %v1934 = vpack.c.b16 %v1933, %v1933
  %v1943 = vunpack.c.l.b16 %v1912
  %v1944 = vunpack.c.l.b16 %v1913
  %v1945 = vunpack.c.l.b16 %v1914
  %v1946 = vunpack.c.l.b16 %v1915
  %v1947 = vunpack.c.l.b16 %v1916
  %v1948 = vunpack.c.l.b16 %v1917
  %v1949 = vunpack.c.l.b16 %v1918
  %v1950 = vunpack.c.l.b16 %v1919
  %v1951 = vpack.c.b16 %v1944, %v1943
  %v1952 = vpack.c.b16 %v1946, %v1945
  %v1953 = vpack.c.b16 %v1948, %v1947
  %v1954 = vpack.c.b16 %v1950, %v1949
  %v1960 = vsel %vm1417, %v1934, 0
  %1962 = vmatprep.subr.bf16.mxu0 0
  %1963 = vmatpush1.bf16.msra.mxu0 %v1951
  %1964 = vmatprep.subr.bf16.mxu0 0
  %1965 = vmatpush1.bf16.msra.mxu0 %v1952
  %1966 = vmatprep.subr.bf16.mxu0 0
  %1967 = vmatpush1.bf16.msra.mxu0 %v1953
  %1968 = vmatprep.subr.bf16.mxu0 0
  %1969 = vmatpush1.bf16.msra.mxu0 %v1954
  %1970 = vmatprep.subr.bf16.mxu0 0
  %1971 = vmatpush1.bf16.msra.mxu0 0
  %1972 = vmatprep.subr.bf16.mxu0 0
  %1973 = vmatpush1.bf16.msra.mxu0 0
  %1974 = vmatprep.subr.bf16.mxu0 0
  %1975 = vmatpush1.bf16.msra.mxu0 0
  %1976 = vmatprep.subr.bf16.mxu0 0
  %1977 = vmatpush1.bf16.msra.mxu0 0
  %1978 = vmatprep.subr.bf16.mxu0 0
  %1979 = vmatpush1.bf16.msra.mxu0 0
  %1980 = vmatprep.subr.bf16.mxu0 0
  %1981 = vmatpush1.bf16.msra.mxu0 0
  %1982 = vmatprep.subr.bf16.mxu0 0
  %1983 = vmatpush1.bf16.msra.mxu0 0
  %1984 = vmatprep.subr.bf16.mxu0 0
  %1985 = vmatpush1.bf16.msra.mxu0 0
  %1986 = vmatprep.subr.bf16.mxu0 0
  %1987 = vmatpush1.bf16.msra.mxu0 0
  %1988 = vmatprep.subr.bf16.mxu0 0
  %1989 = vmatpush1.bf16.msra.mxu0 0
  %1990 = vmatprep.subr.bf16.mxu0 0
  %1991 = vmatpush1.bf16.msra.mxu0 0
  %1992 = vmatprep.subr.bf16.mxu0 0
  %1993 = vmatpush1.bf16.msra.mxu0 0
  %1994 = vmatprep.mubr.bf16.mxu0 0
  %1995 = vmatmul.mubr.bf16.gmra.mrb[0].mxu0 %v1960
  %v1996 = vpop.f32.mrb[0].mxu0
  %v1997 = vadd.f32 0.0, %v1996
  %v1998 = vpop.f32.mrb[0].mxu0
  %v1999 = vpop.f32.mrb[0].mxu0
  %v2000 = vpop.f32.mrb[0].mxu0
  %2001 = vdwg.mxu0
  %v2002 = vadd.f32 %v1910, %v1997
  %s2003 = scalar_lea.vmem %s5, 224
  %v2004 = vld [vmem:[%s2003] sm:$0xf]
  %v2005 = vld [vmem:[%s2003 + $0x4] sm:$0xf]
  %v2006 = vld [vmem:[%s2003 + $0x8] sm:$0xf]
  %v2007 = vld [vmem:[%s2003 + $0xc] sm:$0xf]
  %v2008 = vld [vmem:[%s2003 + $0x10] sm:$0xf]
  %v2009 = vld [vmem:[%s2003 + $0x14] sm:$0xf]
  %v2010 = vld [vmem:[%s2003 + $0x18] sm:$0xf]
  %v2011 = vld [vmem:[%s2003 + $0x1c] sm:$0xf]
  %v2012 = vrot.slane %v1363, 7
  %v2013 = vrot.slane %v1364, 6
  %v2014 = vsel %vm1372, %v2013, %v2012
  %v2015 = vrot.slane %v1365, 5
  %v2016 = vsel %vm1375, %v2015, %v2014
  %v2017 = vrot.slane %v1366, 4
  %v2018 = vsel %vm1378, %v2017, %v2016
  %v2019 = vrot.slane %v1367, 3
  %v2020 = vsel %vm1381, %v2019, %v2018
  %v2021 = vrot.slane %v1368, 2
  %v2022 = vsel %vm1384, %v2021, %v2020
  %v2023 = vrot.slane %v1369, 1
  %v2024 = vsel %vm1387, %v2023, %v2022
  %v2025 = vsel %vm1390, %v1370, %v2024
  %v2026 = vpack.c.b16 %v2025, %v2025
  %v2035 = vunpack.c.l.b16 %v2004
  %v2036 = vunpack.c.l.b16 %v2005
  %v2037 = vunpack.c.l.b16 %v2006
  %v2038 = vunpack.c.l.b16 %v2007
  %v2039 = vunpack.c.l.b16 %v2008
  %v2040 = vunpack.c.l.b16 %v2009
  %v2041 = vunpack.c.l.b16 %v2010
  %v2042 = vunpack.c.l.b16 %v2011
  %v2043 = vpack.c.b16 %v2036, %v2035
  %v2044 = vpack.c.b16 %v2038, %v2037
  %v2045 = vpack.c.b16 %v2040, %v2039
  %v2046 = vpack.c.b16 %v2042, %v2041
  %v2052 = vsel %vm1417, %v2026, 0
  %2054 = vmatprep.subr.bf16.mxu0 0
  %2055 = vmatpush1.bf16.msra.mxu0 %v2043
  %2056 = vmatprep.subr.bf16.mxu0 0
  %2057 = vmatpush1.bf16.msra.mxu0 %v2044
  %2058 = vmatprep.subr.bf16.mxu0 0
  %2059 = vmatpush1.bf16.msra.mxu0 %v2045
  %2060 = vmatprep.subr.bf16.mxu0 0
  %2061 = vmatpush1.bf16.msra.mxu0 %v2046
  %2062 = vmatprep.subr.bf16.mxu0 0
  %2063 = vmatpush1.bf16.msra.mxu0 0
  %2064 = vmatprep.subr.bf16.mxu0 0
  %2065 = vmatpush1.bf16.msra.mxu0 0
  %2066 = vmatprep.subr.bf16.mxu0 0
  %2067 = vmatpush1.bf16.msra.mxu0 0
  %2068 = vmatprep.subr.bf16.mxu0 0
  %2069 = vmatpush1.bf16.msra.mxu0 0
  %2070 = vmatprep.subr.bf16.mxu0 0
  %2071 = vmatpush1.bf16.msra.mxu0 0
  %2072 = vmatprep.subr.bf16.mxu0 0
  %2073 = vmatpush1.bf16.msra.mxu0 0
  %2074 = vmatprep.subr.bf16.mxu0 0
  %2075 = vmatpush1.bf16.msra.mxu0 0
  %2076 = vmatprep.subr.bf16.mxu0 0
  %2077 = vmatpush1.bf16.msra.mxu0 0
  %2078 = vmatprep.subr.bf16.mxu0 0
  %2079 = vmatpush1.bf16.msra.mxu0 0
  %2080 = vmatprep.subr.bf16.mxu0 0
  %2081 = vmatpush1.bf16.msra.mxu0 0
  %2082 = vmatprep.subr.bf16.mxu0 0
  %2083 = vmatpush1.bf16.msra.mxu0 0
  %2084 = vmatprep.subr.bf16.mxu0 0
  %2085 = vmatpush1.bf16.msra.mxu0 0
  %2086 = vmatprep.mubr.bf16.mxu0 0
  %2087 = vmatmul.mubr.bf16.gmra.mrb[0].mxu0 %v2052
  %v2088 = vpop.f32.mrb[0].mxu0
  %v2089 = vadd.f32 0.0, %v2088
  %v2090 = vpop.f32.mrb[0].mxu0
  %v2091 = vpop.f32.mrb[0].mxu0
  %v2092 = vpop.f32.mrb[0].mxu0
  %2093 = vdwg.mxu0
  %v2094 = vadd.f32 %v2002, %v2089
  %s2095 = scalar_lea.vmem %s5, 256
  %v2096 = vld [vmem:[%s2095] sm:$0xf]
  %v2097 = vld [vmem:[%s2095 + $0x4] sm:$0xf]
  %v2098 = vld [vmem:[%s2095 + $0x8] sm:$0xf]
  %v2099 = vld [vmem:[%s2095 + $0xc] sm:$0xf]
  %v2100 = vld [vmem:[%s2095 + $0x10] sm:$0xf]
  %v2101 = vld [vmem:[%s2095 + $0x14] sm:$0xf]
  %v2102 = vld [vmem:[%s2095 + $0x18] sm:$0xf]
  %v2103 = vld [vmem:[%s2095 + $0x1c] sm:$0xf]
  %v2104 = vunpack.c.h.b16 %v1330
  %v2105 = vunpack.c.h.b16 %v1331
  %v2106 = vunpack.c.h.b16 %v1332
  %v2107 = vunpack.c.h.b16 %v1333
  %v2108 = vunpack.c.h.b16 %v1334
  %v2109 = vunpack.c.h.b16 %v1335
  %v2110 = vunpack.c.h.b16 %v1336
  %v2111 = vunpack.c.h.b16 %v1337
  %v2112 = vrot.slane %v2105, 7
  %v2113 = vsel %vm1372, %v2112, %v2104
  %v2114 = vrot.slane %v2106, 6
  %v2115 = vsel %vm1375, %v2114, %v2113
  %v2116 = vrot.slane %v2107, 5
  %v2117 = vsel %vm1378, %v2116, %v2115
  %v2118 = vrot.slane %v2108, 4
  %v2119 = vsel %vm1381, %v2118, %v2117
  %v2120 = vrot.slane %v2109, 3
  %v2121 = vsel %vm1384, %v2120, %v2119
  %v2122 = vrot.slane %v2110, 2
  %v2123 = vsel %vm1387, %v2122, %v2121
  %v2124 = vrot.slane %v2111, 1
  %v2125 = vsel %vm1390, %v2124, %v2123
  %v2126 = vpack.c.b16 %v2125, %v2125
  %v2135 = vunpack.c.l.b16 %v2096
  %v2136 = vunpack.c.l.b16 %v2097
  %v2137 = vunpack.c.l.b16 %v2098
  %v2138 = vunpack.c.l.b16 %v2099
  %v2139 = vunpack.c.l.b16 %v2100
  %v2140 = vunpack.c.l.b16 %v2101
  %v2141 = vunpack.c.l.b16 %v2102
  %v2142 = vunpack.c.l.b16 %v2103
  %v2143 = vpack.c.b16 %v2136, %v2135
  %v2144 = vpack.c.b16 %v2138, %v2137
  %v2145 = vpack.c.b16 %v2140, %v2139
  %v2146 = vpack.c.b16 %v2142, %v2141
  %v2152 = vsel %vm1417, %v2126, 0
  %2154 = vmatprep.subr.bf16.mxu0 0
  %2155 = vmatpush1.bf16.msra.mxu0 %v2143
  %2156 = vmatprep.subr.bf16.mxu0 0
  %2157 = vmatpush1.bf16.msra.mxu0 %v2144
  %2158 = vmatprep.subr.bf16.mxu0 0
  %2159 = vmatpush1.bf16.msra.mxu0 %v2145
  %2160 = vmatprep.subr.bf16.mxu0 0
  %2161 = vmatpush1.bf16.msra.mxu0 %v2146
  %2162 = vmatprep.subr.bf16.mxu0 0
  %2163 = vmatpush1.bf16.msra.mxu0 0
  %2164 = vmatprep.subr.bf16.mxu0 0
  %2165 = vmatpush1.bf16.msra.mxu0 0
  %2166 = vmatprep.subr.bf16.mxu0 0
  %2167 = vmatpush1.bf16.msra.mxu0 0
  %2168 = vmatprep.subr.bf16.mxu0 0
  %2169 = vmatpush1.bf16.msra.mxu0 0
  %2170 = vmatprep.subr.bf16.mxu0 0
  %2171 = vmatpush1.bf16.msra.mxu0 0
  %2172 = vmatprep.subr.bf16.mxu0 0
  %2173 = vmatpush1.bf16.msra.mxu0 0
  %2174 = vmatprep.subr.bf16.mxu0 0
  %2175 = vmatpush1.bf16.msra.mxu0 0
  %2176 = vmatprep.subr.bf16.mxu0 0
  %2177 = vmatpush1.bf16.msra.mxu0 0
  %2178 = vmatprep.subr.bf16.mxu0 0
  %2179 = vmatpush1.bf16.msra.mxu0 0
  %2180 = vmatprep.subr.bf16.mxu0 0
  %2181 = vmatpush1.bf16.msra.mxu0 0
  %2182 = vmatprep.subr.bf16.mxu0 0
  %2183 = vmatpush1.bf16.msra.mxu0 0
  %2184 = vmatprep.subr.bf16.mxu0 0
  %2185 = vmatpush1.bf16.msra.mxu0 0
  %2186 = vmatprep.mubr.bf16.mxu0 0
  %2187 = vmatmul.mubr.bf16.gmra.mrb[0].mxu0 %v2152
  %v2188 = vpop.f32.mrb[0].mxu0
  %v2189 = vadd.f32 0.0, %v2188
  %v2190 = vpop.f32.mrb[0].mxu0
  %v2191 = vpop.f32.mrb[0].mxu0
  %v2192 = vpop.f32.mrb[0].mxu0
  %2193 = vdwg.mxu0
  %v2194 = vadd.f32 %v2094, %v2189
  %s2195 = scalar_lea.vmem %s5, 288
  %v2196 = vld [vmem:[%s2195] sm:$0xf]
  %v2197 = vld [vmem:[%s2195 + $0x4] sm:$0xf]
  %v2198 = vld [vmem:[%s2195 + $0x8] sm:$0xf]
  %v2199 = vld [vmem:[%s2195 + $0xc] sm:$0xf]
  %v2200 = vld [vmem:[%s2195 + $0x10] sm:$0xf]
  %v2201 = vld [vmem:[%s2195 + $0x14] sm:$0xf]
  %v2202 = vld [vmem:[%s2195 + $0x18] sm:$0xf]
  %v2203 = vld [vmem:[%s2195 + $0x1c] sm:$0xf]
  %v2204 = vrot.slane %v2104, 1
  %v2205 = vsel %vm1372, %v2105, %v2204
  %v2206 = vrot.slane %v2106, 7
  %v2207 = vsel %vm1375, %v2206, %v2205
  %v2208 = vrot.slane %v2107, 6
  %v2209 = vsel %vm1378, %v2208, %v2207
  %v2210 = vrot.slane %v2108, 5
  %v2211 = vsel %vm1381, %v2210, %v2209
  %v2212 = vrot.slane %v2109, 4
  %v2213 = vsel %vm1384, %v2212, %v2211
  %v2214 = vrot.slane %v2110, 3
  %v2215 = vsel %vm1387, %v2214, %v2213
  %v2216 = vrot.slane %v2111, 2
  %v2217 = vsel %vm1390, %v2216, %v2215
  %v2218 = vpack.c.b16 %v2217, %v2217
  %v2227 = vunpack.c.l.b16 %v2196
  %v2228 = vunpack.c.l.b16 %v2197
  %v2229 = vunpack.c.l.b16 %v2198
  %v2230 = vunpack.c.l.b16 %v2199
  %v2231 = vunpack.c.l.b16 %v2200
  %v2232 = vunpack.c.l.b16 %v2201
  %v2233 = vunpack.c.l.b16 %v2202
  %v2234 = vunpack.c.l.b16 %v2203
  %v2235 = vpack.c.b16 %v2228, %v2227
  %v2236 = vpack.c.b16 %v2230, %v2229
  %v2237 = vpack.c.b16 %v2232, %v2231
  %v2238 = vpack.c.b16 %v2234, %v2233
  %v2244 = vsel %vm1417, %v2218, 0
  %2246 = vmatprep.subr.bf16.mxu0 0
  %2247 = vmatpush1.bf16.msra.mxu0 %v2235
  %2248 = vmatprep.subr.bf16.mxu0 0
  %2249 = vmatpush1.bf16.msra.mxu0 %v2236
  %2250 = vmatprep.subr.bf16.mxu0 0
  %2251 = vmatpush1.bf16.msra.mxu0 %v2237
  %2252 = vmatprep.subr.bf16.mxu0 0
  %2253 = vmatpush1.bf16.msra.mxu0 %v2238
  %2254 = vmatprep.subr.bf16.mxu0 0
  %2255 = vmatpush1.bf16.msra.mxu0 0
  %2256 = vmatprep.subr.bf16.mxu0 0
  %2257 = vmatpush1.bf16.msra.mxu0 0
  %2258 = vmatprep.subr.bf16.mxu0 0
  %2259 = vmatpush1.bf16.msra.mxu0 0
  %2260 = vmatprep.subr.bf16.mxu0 0
  %2261 = vmatpush1.bf16.msra.mxu0 0
  %2262 = vmatprep.subr.bf16.mxu0 0
  %2263 = vmatpush1.bf16.msra.mxu0 0
  %2264 = vmatprep.subr.bf16.mxu0 0
  %2265 = vmatpush1.bf16.msra.mxu0 0
  %2266 = vmatprep.subr.bf16.mxu0 0
  %2267 = vmatpush1.bf16.msra.mxu0 0
  %2268 = vmatprep.subr.bf16.mxu0 0
  %2269 = vmatpush1.bf16.msra.mxu0 0
  %2270 = vmatprep.subr.bf16.mxu0 0
  %2271 = vmatpush1.bf16.msra.mxu0 0
  %2272 = vmatprep.subr.bf16.mxu0 0
  %2273 = vmatpush1.bf16.msra.mxu0 0
  %2274 = vmatprep.subr.bf16.mxu0 0
  %2275 = vmatpush1.bf16.msra.mxu0 0
  %2276 = vmatprep.subr.bf16.mxu0 0
  %2277 = vmatpush1.bf16.msra.mxu0 0
  %2278 = vmatprep.mubr.bf16.mxu0 0
  %2279 = vmatmul.mubr.bf16.gmra.mrb[0].mxu0 %v2244
  %v2280 = vpop.f32.mrb[0].mxu0
  %v2281 = vadd.f32 0.0, %v2280
  %v2282 = vpop.f32.mrb[0].mxu0
  %v2283 = vpop.f32.mrb[0].mxu0
  %v2284 = vpop.f32.mrb[0].mxu0
  %2285 = vdwg.mxu0
  %v2286 = vadd.f32 %v2194, %v2281
  %s2287 = scalar_lea.vmem %s5, 320
  %v2288 = vld [vmem:[%s2287] sm:$0xf]
  %v2289 = vld [vmem:[%s2287 + $0x4] sm:$0xf]
  %v2290 = vld [vmem:[%s2287 + $0x8] sm:$0xf]
  %v2291 = vld [vmem:[%s2287 + $0xc] sm:$0xf]
  %v2292 = vld [vmem:[%s2287 + $0x10] sm:$0xf]
  %v2293 = vld [vmem:[%s2287 + $0x14] sm:$0xf]
  %v2294 = vld [vmem:[%s2287 + $0x18] sm:$0xf]
  %v2295 = vld [vmem:[%s2287 + $0x1c] sm:$0xf]
  %v2296 = vrot.slane %v2104, 2
  %v2297 = vrot.slane %v2105, 1
  %v2298 = vsel %vm1372, %v2297, %v2296
  %v2299 = vsel %vm1375, %v2106, %v2298
  %v2300 = vrot.slane %v2107, 7
  %v2301 = vsel %vm1378, %v2300, %v2299
  %v2302 = vrot.slane %v2108, 6
  %v2303 = vsel %vm1381, %v2302, %v2301
  %v2304 = vrot.slane %v2109, 5
  %v2305 = vsel %vm1384, %v2304, %v2303
  %v2306 = vrot.slane %v2110, 4
  %v2307 = vsel %vm1387, %v2306, %v2305
  %v2308 = vrot.slane %v2111, 3
  %v2309 = vsel %vm1390, %v2308, %v2307
  %v2310 = vpack.c.b16 %v2309, %v2309
  %v2319 = vunpack.c.l.b16 %v2288
  %v2320 = vunpack.c.l.b16 %v2289
  %v2321 = vunpack.c.l.b16 %v2290
  %v2322 = vunpack.c.l.b16 %v2291
  %v2323 = vunpack.c.l.b16 %v2292
  %v2324 = vunpack.c.l.b16 %v2293
  %v2325 = vunpack.c.l.b16 %v2294
  %v2326 = vunpack.c.l.b16 %v2295
  %v2327 = vpack.c.b16 %v2320, %v2319
  %v2328 = vpack.c.b16 %v2322, %v2321
  %v2329 = vpack.c.b16 %v2324, %v2323
  %v2330 = vpack.c.b16 %v2326, %v2325
  %v2336 = vsel %vm1417, %v2310, 0
  %2338 = vmatprep.subr.bf16.mxu0 0
  %2339 = vmatpush1.bf16.msra.mxu0 %v2327
  %2340 = vmatprep.subr.bf16.mxu0 0
  %2341 = vmatpush1.bf16.msra.mxu0 %v2328
  %2342 = vmatprep.subr.bf16.mxu0 0
  %2343 = vmatpush1.bf16.msra.mxu0 %v2329
  %2344 = vmatprep.subr.bf16.mxu0 0
  %2345 = vmatpush1.bf16.msra.mxu0 %v2330
  %2346 = vmatprep.subr.bf16.mxu0 0
  %2347 = vmatpush1.bf16.msra.mxu0 0
  %2348 = vmatprep.subr.bf16.mxu0 0
  %2349 = vmatpush1.bf16.msra.mxu0 0
  %2350 = vmatprep.subr.bf16.mxu0 0
  %2351 = vmatpush1.bf16.msra.mxu0 0
  %2352 = vmatprep.subr.bf16.mxu0 0
  %2353 = vmatpush1.bf16.msra.mxu0 0
  %2354 = vmatprep.subr.bf16.mxu0 0
  %2355 = vmatpush1.bf16.msra.mxu0 0
  %2356 = vmatprep.subr.bf16.mxu0 0
  %2357 = vmatpush1.bf16.msra.mxu0 0
  %2358 = vmatprep.subr.bf16.mxu0 0
  %2359 = vmatpush1.bf16.msra.mxu0 0
  %2360 = vmatprep.subr.bf16.mxu0 0
  %2361 = vmatpush1.bf16.msra.mxu0 0
  %2362 = vmatprep.subr.bf16.mxu0 0
  %2363 = vmatpush1.bf16.msra.mxu0 0
  %2364 = vmatprep.subr.bf16.mxu0 0
  %2365 = vmatpush1.bf16.msra.mxu0 0
  %2366 = vmatprep.subr.bf16.mxu0 0
  %2367 = vmatpush1.bf16.msra.mxu0 0
  %2368 = vmatprep.subr.bf16.mxu0 0
  %2369 = vmatpush1.bf16.msra.mxu0 0
  %2370 = vmatprep.mubr.bf16.mxu0 0
  %2371 = vmatmul.mubr.bf16.gmra.mrb[0].mxu0 %v2336
  %v2372 = vpop.f32.mrb[0].mxu0
  %v2373 = vadd.f32 0.0, %v2372
  %v2374 = vpop.f32.mrb[0].mxu0
  %v2375 = vpop.f32.mrb[0].mxu0
  %v2376 = vpop.f32.mrb[0].mxu0
  %2377 = vdwg.mxu0
  %v2378 = vadd.f32 %v2286, %v2373
  %s2379 = scalar_lea.vmem %s5, 352
  %v2380 = vld [vmem:[%s2379] sm:$0xf]
  %v2381 = vld [vmem:[%s2379 + $0x4] sm:$0xf]
  %v2382 = vld [vmem:[%s2379 + $0x8] sm:$0xf]
  %v2383 = vld [vmem:[%s2379 + $0xc] sm:$0xf]
  %v2384 = vld [vmem:[%s2379 + $0x10] sm:$0xf]
  %v2385 = vld [vmem:[%s2379 + $0x14] sm:$0xf]
  %v2386 = vld [vmem:[%s2379 + $0x18] sm:$0xf]
  %v2387 = vld [vmem:[%s2379 + $0x1c] sm:$0xf]
  %v2388 = vrot.slane %v2104, 3
  %v2389 = vrot.slane %v2105, 2
  %v2390 = vsel %vm1372, %v2389, %v2388
  %v2391 = vrot.slane %v2106, 1
  %v2392 = vsel %vm1375, %v2391, %v2390
  %v2393 = vsel %vm1378, %v2107, %v2392
  %v2394 = vrot.slane %v2108, 7
  %v2395 = vsel %vm1381, %v2394, %v2393
  %v2396 = vrot.slane %v2109, 6
  %v2397 = vsel %vm1384, %v2396, %v2395
  %v2398 = vrot.slane %v2110, 5
  %v2399 = vsel %vm1387, %v2398, %v2397
  %v2400 = vrot.slane %v2111, 4
  %v2401 = vsel %vm1390, %v2400, %v2399
  %v2402 = vpack.c.b16 %v2401, %v2401
  %v2411 = vunpack.c.l.b16 %v2380
  %v2412 = vunpack.c.l.b16 %v2381
  %v2413 = vunpack.c.l.b16 %v2382
  %v2414 = vunpack.c.l.b16 %v2383
  %v2415 = vunpack.c.l.b16 %v2384
  %v2416 = vunpack.c.l.b16 %v2385
  %v2417 = vunpack.c.l.b16 %v2386
  %v2418 = vunpack.c.l.b16 %v2387
  %v2419 = vpack.c.b16 %v2412, %v2411
  %v2420 = vpack.c.b16 %v2414, %v2413
  %v2421 = vpack.c.b16 %v2416, %v2415
  %v2422 = vpack.c.b16 %v2418, %v2417
  %v2428 = vsel %vm1417, %v2402, 0
  %2430 = vmatprep.subr.bf16.mxu0 0
  %2431 = vmatpush1.bf16.msra.mxu0 %v2419
  %2432 = vmatprep.subr.bf16.mxu0 0
  %2433 = vmatpush1.bf16.msra.mxu0 %v2420
  %2434 = vmatprep.subr.bf16.mxu0 0
  %2435 = vmatpush1.bf16.msra.mxu0 %v2421
  %2436 = vmatprep.subr.bf16.mxu0 0
  %2437 = vmatpush1.bf16.msra.mxu0 %v2422
  %2438 = vmatprep.subr.bf16.mxu0 0
  %2439 = vmatpush1.bf16.msra.mxu0 0
  %2440 = vmatprep.subr.bf16.mxu0 0
  %2441 = vmatpush1.bf16.msra.mxu0 0
  %2442 = vmatprep.subr.bf16.mxu0 0
  %2443 = vmatpush1.bf16.msra.mxu0 0
  %2444 = vmatprep.subr.bf16.mxu0 0
  %2445 = vmatpush1.bf16.msra.mxu0 0
  %2446 = vmatprep.subr.bf16.mxu0 0
  %2447 = vmatpush1.bf16.msra.mxu0 0
  %2448 = vmatprep.subr.bf16.mxu0 0
  %2449 = vmatpush1.bf16.msra.mxu0 0
  %2450 = vmatprep.subr.bf16.mxu0 0
  %2451 = vmatpush1.bf16.msra.mxu0 0
  %2452 = vmatprep.subr.bf16.mxu0 0
  %2453 = vmatpush1.bf16.msra.mxu0 0
  %2454 = vmatprep.subr.bf16.mxu0 0
  %2455 = vmatpush1.bf16.msra.mxu0 0
  %2456 = vmatprep.subr.bf16.mxu0 0
  %2457 = vmatpush1.bf16.msra.mxu0 0
  %2458 = vmatprep.subr.bf16.mxu0 0
  %2459 = vmatpush1.bf16.msra.mxu0 0
  %2460 = vmatprep.subr.bf16.mxu0 0
  %2461 = vmatpush1.bf16.msra.mxu0 0
  %2462 = vmatprep.mubr.bf16.mxu0 0
  %2463 = vmatmul.mubr.bf16.gmra.mrb[0].mxu0 %v2428
  %v2464 = vpop.f32.mrb[0].mxu0
  %v2465 = vadd.f32 0.0, %v2464
  %v2466 = vpop.f32.mrb[0].mxu0
  %v2467 = vpop.f32.mrb[0].mxu0
  %v2468 = vpop.f32.mrb[0].mxu0
  %2469 = vdwg.mxu0
  %v2470 = vadd.f32 %v2378, %v2465
  %s2471 = scalar_lea.vmem %s5, 384
  %v2472 = vld [vmem:[%s2471] sm:$0xf]
  %v2473 = vld [vmem:[%s2471 + $0x4] sm:$0xf]
  %v2474 = vld [vmem:[%s2471 + $0x8] sm:$0xf]
  %v2475 = vld [vmem:[%s2471 + $0xc] sm:$0xf]
  %v2476 = vld [vmem:[%s2471 + $0x10] sm:$0xf]
  %v2477 = vld [vmem:[%s2471 + $0x14] sm:$0xf]
  %v2478 = vld [vmem:[%s2471 + $0x18] sm:$0xf]
  %v2479 = vld [vmem:[%s2471 + $0x1c] sm:$0xf]
  %v2480 = vrot.slane %v2104, 4
  %v2481 = vrot.slane %v2105, 3
  %v2482 = vsel %vm1372, %v2481, %v2480
  %v2483 = vrot.slane %v2106, 2
  %v2484 = vsel %vm1375, %v2483, %v2482
  %v2485 = vrot.slane %v2107, 1
  %v2486 = vsel %vm1378, %v2485, %v2484
  %v2487 = vsel %vm1381, %v2108, %v2486
  %v2488 = vrot.slane %v2109, 7
  %v2489 = vsel %vm1384, %v2488, %v2487
  %v2490 = vrot.slane %v2110, 6
  %v2491 = vsel %vm1387, %v2490, %v2489
  %v2492 = vrot.slane %v2111, 5
  %v2493 = vsel %vm1390, %v2492, %v2491
  %v2494 = vpack.c.b16 %v2493, %v2493
  %v2503 = vunpack.c.l.b16 %v2472
  %v2504 = vunpack.c.l.b16 %v2473
  %v2505 = vunpack.c.l.b16 %v2474
  %v2506 = vunpack.c.l.b16 %v2475
  %v2507 = vunpack.c.l.b16 %v2476
  %v2508 = vunpack.c.l.b16 %v2477
  %v2509 = vunpack.c.l.b16 %v2478
  %v2510 = vunpack.c.l.b16 %v2479
  %v2511 = vpack.c.b16 %v2504, %v2503
  %v2512 = vpack.c.b16 %v2506, %v2505
  %v2513 = vpack.c.b16 %v2508, %v2507
  %v2514 = vpack.c.b16 %v2510, %v2509
  %v2520 = vsel %vm1417, %v2494, 0
  %2522 = vmatprep.subr.bf16.mxu0 0
  %2523 = vmatpush1.bf16.msra.mxu0 %v2511
  %2524 = vmatprep.subr.bf16.mxu0 0
  %2525 = vmatpush1.bf16.msra.mxu0 %v2512
  %2526 = vmatprep.subr.bf16.mxu0 0
  %2527 = vmatpush1.bf16.msra.mxu0 %v2513
  %2528 = vmatprep.subr.bf16.mxu0 0
  %2529 = vmatpush1.bf16.msra.mxu0 %v2514
  %2530 = vmatprep.subr.bf16.mxu0 0
  %2531 = vmatpush1.bf16.msra.mxu0 0
  %2532 = vmatprep.subr.bf16.mxu0 0
  %2533 = vmatpush1.bf16.msra.mxu0 0
  %2534 = vmatprep.subr.bf16.mxu0 0
  %2535 = vmatpush1.bf16.msra.mxu0 0
  %2536 = vmatprep.subr.bf16.mxu0 0
  %2537 = vmatpush1.bf16.msra.mxu0 0
  %2538 = vmatprep.subr.bf16.mxu0 0
  %2539 = vmatpush1.bf16.msra.mxu0 0
  %2540 = vmatprep.subr.bf16.mxu0 0
  %2541 = vmatpush1.bf16.msra.mxu0 0
  %2542 = vmatprep.subr.bf16.mxu0 0
  %2543 = vmatpush1.bf16.msra.mxu0 0
  %2544 = vmatprep.subr.bf16.mxu0 0
  %2545 = vmatpush1.bf16.msra.mxu0 0
  %2546 = vmatprep.subr.bf16.mxu0 0
  %2547 = vmatpush1.bf16.msra.mxu0 0
  %2548 = vmatprep.subr.bf16.mxu0 0
  %2549 = vmatpush1.bf16.msra.mxu0 0
  %2550 = vmatprep.subr.bf16.mxu0 0
  %2551 = vmatpush1.bf16.msra.mxu0 0
  %2552 = vmatprep.subr.bf16.mxu0 0
  %2553 = vmatpush1.bf16.msra.mxu0 0
  %2554 = vmatprep.mubr.bf16.mxu0 0
  %2555 = vmatmul.mubr.bf16.gmra.mrb[0].mxu0 %v2520
  %v2556 = vpop.f32.mrb[0].mxu0
  %v2557 = vadd.f32 0.0, %v2556
  %v2558 = vpop.f32.mrb[0].mxu0
  %v2559 = vpop.f32.mrb[0].mxu0
  %v2560 = vpop.f32.mrb[0].mxu0
  %2561 = vdwg.mxu0
  %v2562 = vadd.f32 %v2470, %v2557
  %s2563 = scalar_lea.vmem %s5, 416
  %v2564 = vld [vmem:[%s2563] sm:$0xf]
  %v2565 = vld [vmem:[%s2563 + $0x4] sm:$0xf]
  %v2566 = vld [vmem:[%s2563 + $0x8] sm:$0xf]
  %v2567 = vld [vmem:[%s2563 + $0xc] sm:$0xf]
  %v2568 = vld [vmem:[%s2563 + $0x10] sm:$0xf]
  %v2569 = vld [vmem:[%s2563 + $0x14] sm:$0xf]
  %v2570 = vld [vmem:[%s2563 + $0x18] sm:$0xf]
  %v2571 = vld [vmem:[%s2563 + $0x1c] sm:$0xf]
  %v2572 = vrot.slane %v2104, 5
  %v2573 = vrot.slane %v2105, 4
  %v2574 = vsel %vm1372, %v2573, %v2572
  %v2575 = vrot.slane %v2106, 3
  %v2576 = vsel %vm1375, %v2575, %v2574
  %v2577 = vrot.slane %v2107, 2
  %v2578 = vsel %vm1378, %v2577, %v2576
  %v2579 = vrot.slane %v2108, 1
  %v2580 = vsel %vm1381, %v2579, %v2578
  %v2581 = vsel %vm1384, %v2109, %v2580
  %v2582 = vrot.slane %v2110, 7
  %v2583 = vsel %vm1387, %v2582, %v2581
  %v2584 = vrot.slane %v2111, 6
  %v2585 = vsel %vm1390, %v2584, %v2583
  %v2586 = vpack.c.b16 %v2585, %v2585
  %v2595 = vunpack.c.l.b16 %v2564
  %v2596 = vunpack.c.l.b16 %v2565
  %v2597 = vunpack.c.l.b16 %v2566
  %v2598 = vunpack.c.l.b16 %v2567
  %v2599 = vunpack.c.l.b16 %v2568
  %v2600 = vunpack.c.l.b16 %v2569
  %v2601 = vunpack.c.l.b16 %v2570
  %v2602 = vunpack.c.l.b16 %v2571
  %v2603 = vpack.c.b16 %v2596, %v2595
  %v2604 = vpack.c.b16 %v2598, %v2597
  %v2605 = vpack.c.b16 %v2600, %v2599
  %v2606 = vpack.c.b16 %v2602, %v2601
  %v2612 = vsel %vm1417, %v2586, 0
  %2614 = vmatprep.subr.bf16.mxu0 0
  %2615 = vmatpush1.bf16.msra.mxu0 %v2603
  %2616 = vmatprep.subr.bf16.mxu0 0
  %2617 = vmatpush1.bf16.msra.mxu0 %v2604
  %2618 = vmatprep.subr.bf16.mxu0 0
  %2619 = vmatpush1.bf16.msra.mxu0 %v2605
  %2620 = vmatprep.subr.bf16.mxu0 0
  %2621 = vmatpush1.bf16.msra.mxu0 %v2606
  %2622 = vmatprep.subr.bf16.mxu0 0
  %2623 = vmatpush1.bf16.msra.mxu0 0
  %2624 = vmatprep.subr.bf16.mxu0 0
  %2625 = vmatpush1.bf16.msra.mxu0 0
  %2626 = vmatprep.subr.bf16.mxu0 0
  %2627 = vmatpush1.bf16.msra.mxu0 0
  %2628 = vmatprep.subr.bf16.mxu0 0
  %2629 = vmatpush1.bf16.msra.mxu0 0
  %2630 = vmatprep.subr.bf16.mxu0 0
  %2631 = vmatpush1.bf16.msra.mxu0 0
  %2632 = vmatprep.subr.bf16.mxu0 0
  %2633 = vmatpush1.bf16.msra.mxu0 0
  %2634 = vmatprep.subr.bf16.mxu0 0
  %2635 = vmatpush1.bf16.msra.mxu0 0
  %2636 = vmatprep.subr.bf16.mxu0 0
  %2637 = vmatpush1.bf16.msra.mxu0 0
  %2638 = vmatprep.subr.bf16.mxu0 0
  %2639 = vmatpush1.bf16.msra.mxu0 0
  %2640 = vmatprep.subr.bf16.mxu0 0
  %2641 = vmatpush1.bf16.msra.mxu0 0
  %2642 = vmatprep.subr.bf16.mxu0 0
  %2643 = vmatpush1.bf16.msra.mxu0 0
  %2644 = vmatprep.subr.bf16.mxu0 0
  %2645 = vmatpush1.bf16.msra.mxu0 0
  %2646 = vmatprep.mubr.bf16.mxu0 0
  %2647 = vmatmul.mubr.bf16.gmra.mrb[0].mxu0 %v2612
  %v2648 = vpop.f32.mrb[0].mxu0
  %v2649 = vadd.f32 0.0, %v2648
  %v2650 = vpop.f32.mrb[0].mxu0
  %v2651 = vpop.f32.mrb[0].mxu0
  %v2652 = vpop.f32.mrb[0].mxu0
  %2653 = vdwg.mxu0
  %v2654 = vadd.f32 %v2562, %v2649
  %s2655 = scalar_lea.vmem %s5, 448
  %v2656 = vld [vmem:[%s2655] sm:$0xf]
  %v2657 = vld [vmem:[%s2655 + $0x4] sm:$0xf]
  %v2658 = vld [vmem:[%s2655 + $0x8] sm:$0xf]
  %v2659 = vld [vmem:[%s2655 + $0xc] sm:$0xf]
  %v2660 = vld [vmem:[%s2655 + $0x10] sm:$0xf]
  %v2661 = vld [vmem:[%s2655 + $0x14] sm:$0xf]
  %v2662 = vld [vmem:[%s2655 + $0x18] sm:$0xf]
  %v2663 = vld [vmem:[%s2655 + $0x1c] sm:$0xf]
  %v2664 = vrot.slane %v2104, 6
  %v2665 = vrot.slane %v2105, 5
  %v2666 = vsel %vm1372, %v2665, %v2664
  %v2667 = vrot.slane %v2106, 4
  %v2668 = vsel %vm1375, %v2667, %v2666
  %v2669 = vrot.slane %v2107, 3
  %v2670 = vsel %vm1378, %v2669, %v2668
  %v2671 = vrot.slane %v2108, 2
  %v2672 = vsel %vm1381, %v2671, %v2670
  %v2673 = vrot.slane %v2109, 1
  %v2674 = vsel %vm1384, %v2673, %v2672
  %v2675 = vsel %vm1387, %v2110, %v2674
  %v2676 = vrot.slane %v2111, 7
  %v2677 = vsel %vm1390, %v2676, %v2675
  %v2678 = vpack.c.b16 %v2677, %v2677
  %v2687 = vunpack.c.l.b16 %v2656
  %v2688 = vunpack.c.l.b16 %v2657
  %v2689 = vunpack.c.l.b16 %v2658
  %v2690 = vunpack.c.l.b16 %v2659
  %v2691 = vunpack.c.l.b16 %v2660
  %v2692 = vunpack.c.l.b16 %v2661
  %v2693 = vunpack.c.l.b16 %v2662
  %v2694 = vunpack.c.l.b16 %v2663
  %v2695 = vpack.c.b16 %v2688, %v2687
  %v2696 = vpack.c.b16 %v2690, %v2689
  %v2697 = vpack.c.b16 %v2692, %v2691
  %v2698 = vpack.c.b16 %v2694, %v2693
  %v2704 = vsel %vm1417, %v2678, 0
  %2706 = vmatprep.subr.bf16.mxu0 0
  %2707 = vmatpush1.bf16.msra.mxu0 %v2695
  %2708 = vmatprep.subr.bf16.mxu0 0
  %2709 = vmatpush1.bf16.msra.mxu0 %v2696
  %2710 = vmatprep.subr.bf16.mxu0 0
  %2711 = vmatpush1.bf16.msra.mxu0 %v2697
  %2712 = vmatprep.subr.bf16.mxu0 0
  %2713 = vmatpush1.bf16.msra.mxu0 %v2698
  %2714 = vmatprep.subr.bf16.mxu0 0
  %2715 = vmatpush1.bf16.msra.mxu0 0
  %2716 = vmatprep.subr.bf16.mxu0 0
  %2717 = vmatpush1.bf16.msra.mxu0 0
  %2718 = vmatprep.subr.bf16.mxu0 0
  %2719 = vmatpush1.bf16.msra.mxu0 0
  %2720 = vmatprep.subr.bf16.mxu0 0
  %2721 = vmatpush1.bf16.msra.mxu0 0
  %2722 = vmatprep.subr.bf16.mxu0 0
  %2723 = vmatpush1.bf16.msra.mxu0 0
  %2724 = vmatprep.subr.bf16.mxu0 0
  %2725 = vmatpush1.bf16.msra.mxu0 0
  %2726 = vmatprep.subr.bf16.mxu0 0
  %2727 = vmatpush1.bf16.msra.mxu0 0
  %2728 = vmatprep.subr.bf16.mxu0 0
  %2729 = vmatpush1.bf16.msra.mxu0 0
  %2730 = vmatprep.subr.bf16.mxu0 0
  %2731 = vmatpush1.bf16.msra.mxu0 0
  %2732 = vmatprep.subr.bf16.mxu0 0
  %2733 = vmatpush1.bf16.msra.mxu0 0
  %2734 = vmatprep.subr.bf16.mxu0 0
  %2735 = vmatpush1.bf16.msra.mxu0 0
  %2736 = vmatprep.subr.bf16.mxu0 0
  %2737 = vmatpush1.bf16.msra.mxu0 0
  %2738 = vmatprep.mubr.bf16.mxu0 0
  %2739 = vmatmul.mubr.bf16.gmra.mrb[0].mxu0 %v2704
  %v2740 = vpop.f32.mrb[0].mxu0
  %v2741 = vadd.f32 0.0, %v2740
  %v2742 = vpop.f32.mrb[0].mxu0
  %v2743 = vpop.f32.mrb[0].mxu0
  %v2744 = vpop.f32.mrb[0].mxu0
  %2745 = vdwg.mxu0
  %v2746 = vadd.f32 %v2654, %v2741
  %s2747 = scalar_lea.vmem %s5, 480
  %v2748 = vld [vmem:[%s2747] sm:$0xf]
  %v2749 = vld [vmem:[%s2747 + $0x4] sm:$0xf]
  %v2750 = vld [vmem:[%s2747 + $0x8] sm:$0xf]
  %v2751 = vld [vmem:[%s2747 + $0xc] sm:$0xf]
  %v2752 = vld [vmem:[%s2747 + $0x10] sm:$0xf]
  %v2753 = vld [vmem:[%s2747 + $0x14] sm:$0xf]
  %v2754 = vld [vmem:[%s2747 + $0x18] sm:$0xf]
  %v2755 = vld [vmem:[%s2747 + $0x1c] sm:$0xf]
  %v2756 = vrot.slane %v2104, 7
  %v2757 = vrot.slane %v2105, 6
  %v2758 = vsel %vm1372, %v2757, %v2756
  %v2759 = vrot.slane %v2106, 5
  %v2760 = vsel %vm1375, %v2759, %v2758
  %v2761 = vrot.slane %v2107, 4
  %v2762 = vsel %vm1378, %v2761, %v2760
  %v2763 = vrot.slane %v2108, 3
  %v2764 = vsel %vm1381, %v2763, %v2762
  %v2765 = vrot.slane %v2109, 2
  %v2766 = vsel %vm1384, %v2765, %v2764
  %v2767 = vrot.slane %v2110, 1
  %v2768 = vsel %vm1387, %v2767, %v2766
  %v2769 = vsel %vm1390, %v2111, %v2768
  %v2770 = vpack.c.b16 %v2769, %v2769
  %v2779 = vunpack.c.l.b16 %v2748
  %v2780 = vunpack.c.l.b16 %v2749
  %v2781 = vunpack.c.l.b16 %v2750
  %v2782 = vunpack.c.l.b16 %v2751
  %v2783 = vunpack.c.l.b16 %v2752
  %v2784 = vunpack.c.l.b16 %v2753
  %v2785 = vunpack.c.l.b16 %v2754
  %v2786 = vunpack.c.l.b16 %v2755
  %v2787 = vpack.c.b16 %v2780, %v2779
  %v2788 = vpack.c.b16 %v2782, %v2781
  %v2789 = vpack.c.b16 %v2784, %v2783
  %v2790 = vpack.c.b16 %v2786, %v2785
  %v2796 = vsel %vm1417, %v2770, 0
  %2798 = vmatprep.subr.bf16.mxu0 0
  %2799 = vmatpush1.bf16.msra.mxu0 %v2787
  %2800 = vmatprep.subr.bf16.mxu0 0
  %2801 = vmatpush1.bf16.msra.mxu0 %v2788
  %2802 = vmatprep.subr.bf16.mxu0 0
  %2803 = vmatpush1.bf16.msra.mxu0 %v2789
  %2804 = vmatprep.subr.bf16.mxu0 0
  %2805 = vmatpush1.bf16.msra.mxu0 %v2790
  %2806 = vmatprep.subr.bf16.mxu0 0
  %2807 = vmatpush1.bf16.msra.mxu0 0
  %2808 = vmatprep.subr.bf16.mxu0 0
  %2809 = vmatpush1.bf16.msra.mxu0 0
  %2810 = vmatprep.subr.bf16.mxu0 0
  %2811 = vmatpush1.bf16.msra.mxu0 0
  %2812 = vmatprep.subr.bf16.mxu0 0
  %2813 = vmatpush1.bf16.msra.mxu0 0
  %2814 = vmatprep.subr.bf16.mxu0 0
  %2815 = vmatpush1.bf16.msra.mxu0 0
  %2816 = vmatprep.subr.bf16.mxu0 0
  %2817 = vmatpush1.bf16.msra.mxu0 0
  %2818 = vmatprep.subr.bf16.mxu0 0
  %2819 = vmatpush1.bf16.msra.mxu0 0
  %2820 = vmatprep.subr.bf16.mxu0 0
  %2821 = vmatpush1.bf16.msra.mxu0 0
  %2822 = vmatprep.subr.bf16.mxu0 0
  %2823 = vmatpush1.bf16.msra.mxu0 0
  %2824 = vmatprep.subr.bf16.mxu0 0
  %2825 = vmatpush1.bf16.msra.mxu0 0
  %2826 = vmatprep.subr.bf16.mxu0 0
  %2827 = vmatpush1.bf16.msra.mxu0 0
  %2828 = vmatprep.subr.bf16.mxu0 0
  %2829 = vmatpush1.bf16.msra.mxu0 0
  %2830 = vmatprep.mubr.bf16.mxu0 0
  %2831 = vmatmul.mubr.bf16.gmra.mrb[0].mxu0 %v2796
  %v2832 = vpop.f32.mrb[0].mxu0
  %v2833 = vadd.f32 0.0, %v2832
  %v2834 = vpop.f32.mrb[0].mxu0
  %v2835 = vpop.f32.mrb[0].mxu0
  %v2836 = vpop.f32.mrb[0].mxu0
  %2837 = vdwg.mxu0
  %v2838 = vadd.f32 %v2746, %v2833
  %v2839 = vld [vmem:[%s6] sm:$0x1]
  %v2841 = vlaneseq
  %v2842 = vshrl.u32 %v2841, 7
  %v2843 = vsub.s32 0, %v2842
  %v2844 = vrot.slane %v2839, %v2843
  %v2846 = vadd.f32 %v2838, %v2844
  %v2847 = vmax.f32 %v2846, 0.0
  %v2848 = vpack.c.bf16 %v2847, %v2847
  %v2849 = vld [vmem:[%s7] sm:$0xf]
  %v2850 = vld [vmem:[%s7 + $0x4] sm:$0xf]
  %v2851 = vld [vmem:[%s7 + $0x8] sm:$0xf]
  %v2852 = vld [vmem:[%s7 + $0xc] sm:$0xf]
  %v2853 = vld [vmem:[%s7 + $0x10] sm:$0xf]
  %v2854 = vld [vmem:[%s7 + $0x14] sm:$0xf]
  %v2855 = vld [vmem:[%s7 + $0x18] sm:$0xf]
  %v2856 = vld [vmem:[%s7 + $0x1c] sm:$0xf]
  %v2857 = vld [vmem:[%s7 + $0x20] sm:$0xf]
  %v2858 = vld [vmem:[%s7 + $0x24] sm:$0xf]
  %v2859 = vld [vmem:[%s7 + $0x28] sm:$0xf]
  %v2860 = vld [vmem:[%s7 + $0x2c] sm:$0xf]
  %v2861 = vld [vmem:[%s7 + $0x30] sm:$0xf]
  %v2862 = vld [vmem:[%s7 + $0x34] sm:$0xf]
  %v2863 = vld [vmem:[%s7 + $0x38] sm:$0xf]
  %v2864 = vld [vmem:[%s7 + $0x3c] sm:$0xf]
  %v2865 = vld [vmem:[%s8] sm:$0x1]
  %v2867 = vlaneseq
  %v2868 = vshrl.u32 %v2867, 7
  %v2869 = vsub.s32 0, %v2868
  %v2870 = vrot.slane %v2865, %v2869
  %v2888 = vunpack.c.l.b16 %v2849
  %v2889 = vunpack.c.l.b16 %v2850
  %v2890 = vunpack.c.l.b16 %v2851
  %v2891 = vunpack.c.l.b16 %v2852
  %v2892 = vunpack.c.l.b16 %v2853
  %v2893 = vunpack.c.l.b16 %v2854
  %v2894 = vunpack.c.l.b16 %v2855
  %v2895 = vunpack.c.l.b16 %v2856
  %v2896 = vunpack.c.l.b16 %v2857
  %v2897 = vunpack.c.l.b16 %v2858
  %v2898 = vunpack.c.l.b16 %v2859
  %v2899 = vunpack.c.l.b16 %v2860
  %v2900 = vunpack.c.l.b16 %v2861
  %v2901 = vunpack.c.l.b16 %v2862
  %v2902 = vunpack.c.l.b16 %v2863
  %v2903 = vunpack.c.l.b16 %v2864
  %v2904 = vpack.c.b16 %v2889, %v2888
  %v2905 = vpack.c.b16 %v2891, %v2890
  %v2906 = vpack.c.b16 %v2893, %v2892
  %v2907 = vpack.c.b16 %v2895, %v2894
  %v2908 = vpack.c.b16 %v2897, %v2896
  %v2909 = vpack.c.b16 %v2899, %v2898
  %v2910 = vpack.c.b16 %v2901, %v2900
  %v2911 = vpack.c.b16 %v2903, %v2902
  %2920 = vmatprep.subr.bf16.mxu0 0
  %2921 = vmatpush1.bf16.msra.mxu0 %v2904
  %2922 = vmatprep.subr.bf16.mxu0 0
  %2923 = vmatpush1.bf16.msra.mxu0 %v2905
  %2924 = vmatprep.subr.bf16.mxu0 0
  %2925 = vmatpush1.bf16.msra.mxu0 %v2906
  %2926 = vmatprep.subr.bf16.mxu0 0
  %2927 = vmatpush1.bf16.msra.mxu0 %v2907
  %2928 = vmatprep.subr.bf16.mxu0 0
  %2929 = vmatpush1.bf16.msra.mxu0 %v2908
  %2930 = vmatprep.subr.bf16.mxu0 0
  %2931 = vmatpush1.bf16.msra.mxu0 %v2909
  %2932 = vmatprep.subr.bf16.mxu0 0
  %2933 = vmatpush1.bf16.msra.mxu0 %v2910
  %2934 = vmatprep.subr.bf16.mxu0 0
  %2935 = vmatpush1.bf16.msra.mxu0 %v2911
  %2936 = vmatprep.subr.bf16.mxu0 0
  %2937 = vmatpush1.bf16.msra.mxu0 0
  %2938 = vmatprep.subr.bf16.mxu0 0
  %2939 = vmatpush1.bf16.msra.mxu0 0
  %2940 = vmatprep.subr.bf16.mxu0 0
  %2941 = vmatpush1.bf16.msra.mxu0 0
  %2942 = vmatprep.subr.bf16.mxu0 0
  %2943 = vmatpush1.bf16.msra.mxu0 0
  %2944 = vmatprep.subr.bf16.mxu0 0
  %2945 = vmatpush1.bf16.msra.mxu0 0
  %2946 = vmatprep.subr.bf16.mxu0 0
  %2947 = vmatpush1.bf16.msra.mxu0 0
  %2948 = vmatprep.subr.bf16.mxu0 0
  %2949 = vmatpush1.bf16.msra.mxu0 0
  %2950 = vmatprep.subr.bf16.mxu0 0
  %2951 = vmatpush1.bf16.msra.mxu0 0
  %2952 = vmatprep.mubr.bf16.mxu0 0
  %2953 = vmatmul.mubr.bf16.gmra.mrb[0].mxu0 %v2848
  %v2954 = vpop.f32.mrb[0].mxu0
  %v2955 = vadd.f32 %v2870, %v2954
  %v2956 = vpop.f32.mrb[0].mxu0
  %v2957 = vpop.f32.mrb[0].mxu0
  %v2958 = vpop.f32.mrb[0].mxu0
  %2959 = vdwg.mxu0
  %v2960 = vand.u32 2147483647, %v2955
  %v2961 = vsub.f32 0.0, %v2960
  %v2962 = vmul.f32 %v2961, 1.442695
  %v2963 = vpow.pop %v2962
  %v2964 = vadd.f32 %v2963, 1.0
  %v2965 = vrcp.pop %v2964
  %vm2966 = vcmp.ge.f32.partialorder %v2955, 0.0
  %v2967 = vsub.f32 1.0, %v2965
  %v2968 = vsel %vm2966, %v2965, %v2967
  %2969 = vst [vmem:[%s9] sm:$0xff] %v2968
  // Predicated region
  $region38: #{mnist_classifier_forward.1} parent=0 // pred_check
    _
  $region39: #{mnist_classifier_forward.1} parent=0 // pred_check_branch
    %2971 = sbr.rel (0) target = $region41
  $region40: #{mnist_classifier_forward.1} parent=0 // pred_region
    _
  $region41: #{mnist_classifier_forward.1} parent=0 // pred_fallthru
    _
  // Predicated region
  $region42: #{mnist_classifier_forward.1} parent=0 // pred_check
    _
  $region43: #{mnist_classifier_forward.1} parent=0 // pred_check_branch
    %2973 = sbr.rel (0) target = $region45
  $region44: #{mnist_classifier_forward.1} parent=0 // pred_region
    _
  $region45: #{mnist_classifier_forward.1} parent=0 // pred_fallthru
    _

</llo_original>
